<compile_context>
chip_gen: v7x
topology: tpu7x:2x2x1
jax: 0.10.0
libtpu: 0.0.40
codegen_flags: <defaults>
</compile_context>

<pallas_src>
import functools

import jax
import jax.numpy as jnp
from jax.experimental import pallas as pl
from jax.experimental.pallas import tpu as pltpu


def _round_up(x, m):
    return ((x + m - 1) // m) * m


def _pad_axis(a, axis, target):
    cur = a.shape[axis]
    if cur >= target:
        return a
    widths = [(0, 0)] * a.ndim
    widths[axis] = (0, target - cur)
    return jnp.pad(a, widths)


def gine_kernel(num_layers, adj_ref, pool_ref, x_ref, w_ref, b_ref, out_ref):
    """All refs are whole-array VMEM blocks.

    adj_ref : [Np, Np] bf16   dense adjacency + self loops (dst, src)
    pool_ref: [Bp, Np] bf16   one-hot global_add_pool matrix
    x_ref   : [Np, D]  bf16   embedded node features (lane-padded)
    w_ref   : [2L+3, D, D] bf16  stacked weight matrices ([in, out], zero-padded)
    b_ref   : [2L+3, D]    f32   stacked biases (zero-padded)
    out_ref : [Bp, D]      f32
    """
    x = x_ref[...]
    adj = adj_ref[...]

    def dense(h_f32, idx, relu):
        # [M, D] @ [D, D] on the MXU with f32 accumulation; bias add on VPU.
        h = jnp.dot(h_f32.astype(jnp.bfloat16), w_ref[idx],
                    preferred_element_type=jnp.float32) + b_ref[idx:idx + 1, :]
        return jnp.maximum(h, 0.0) if relu else h

    # --- GINConv layers: x' = nn((1+eps)*x + sum_{j in N(i)} x_j), eps = 0 ---
    # Self-loop is folded into adj, so aggregation is a single MXU pass.
    for l in range(num_layers):                       # static unroll
        agg = jnp.dot(adj, x, preferred_element_type=jnp.float32)   # [Np, D] f32
        h = dense(agg, 2 * l, relu=True)
        x = dense(h, 2 * l + 1, relu=False).astype(jnp.bfloat16)

    # --- global_add_pool: sum node features per graph (one-hot matmul) ---
    pooled = jnp.dot(pool_ref[...], x, preferred_element_type=jnp.float32)   # [Bp, D]

    # --- readout MLP: D -> D -> D -> D (all lane-dense; padding is exact) ---
    h = dense(pooled, 2 * num_layers, relu=True)
    h = dense(h, 2 * num_layers + 1, relu=True)
    out_ref[...] = dense(h, 2 * num_layers + 2, relu=False)


def init_params(key, hidden_dim, num_layers, output_dim):
    if output_dim == 1:
        input_dim, edge_dim = 28, 4
    else:
        input_dim, edge_dim = 9, 3
    h, h2, h4 = hidden_dim, hidden_dim // 2, hidden_dim // 4

    keys = iter(jax.random.split(key, 32))

    def w(shape, scale):
        return (scale * jax.random.normal(next(keys), shape)).astype(jnp.float32)

    return {
        "node_emb": w((input_dim, h), 1.0),
        "edge_emb": w((edge_dim, h), 1.0),
        # GINConv MLPs, stacked along a leading layer axis ([in, out] layout).
        "w1": w((num_layers, h, h), 1.0 / jnp.sqrt(h)),
        "b1": w((num_layers, 1, h), 0.01),
        "w2": w((num_layers, h, h), 1.0 / jnp.sqrt(h)),
        "b2": w((num_layers, 1, h), 0.01),
        # readout MLP
        "w3": w((h, h2), 1.0 / jnp.sqrt(h)),
        "b3": w((1, h2), 0.01),
        "w4": w((h2, h4), 1.0 / jnp.sqrt(h2)),
        "b4": w((1, h4), 0.01),
        "w5": w((h4, output_dim), 1.0 / jnp.sqrt(h4)),
        "b5": w((1, output_dim), 0.01),
    }


def prepare_params(params, num_layers):
    """Hoisted, call-once padding/casting/stacking of the model parameters.

    All weight matrices are zero-padded to a common [D, D] (D = max lane-padded
    feature dim) and stacked into one bf16 array; biases into one f32 array.
    Zero padding is exact through matmul / bias / ReLU.
    """
    h = params["w1"].shape[1]
    h2 = params["w3"].shape[1]
    h4 = params["w4"].shape[1]
    out_dim = params["w5"].shape[1]
    d = max(_round_up(h, 128), _round_up(h2, 128),
            _round_up(h4, 128), _round_up(out_dim, 128))

    def pad_w(w):        # [in, out] -> [d, d] bf16
        return _pad_axis(_pad_axis(w, 0, d), 1, d).astype(jnp.bfloat16)

    def pad_b(b):        # [*, out] -> [d] f32
        return _pad_axis(b.reshape(-1), 0, d).astype(jnp.float32)

    ws, bs = [], []
    for l in range(num_layers):
        ws.append(pad_w(params["w1"][l])); bs.append(pad_b(params["b1"][l]))
        ws.append(pad_w(params["w2"][l])); bs.append(pad_b(params["b2"][l]))
    ws += [pad_w(params["w3"]), pad_w(params["w4"]), pad_w(params["w5"])]
    bs += [pad_b(params["b3"]), pad_b(params["b4"]), pad_b(params["b5"])]

    return {
        "node_emb": _pad_axis(params["node_emb"], 1, d).astype(jnp.bfloat16),
        "edge_emb": params["edge_emb"],
        "W": jnp.stack(ws),   # [2L+3, d, d] bf16
        "B": jnp.stack(bs),   # [2L+3, d]    f32
    }


@functools.partial(jax.jit, static_argnames=("num_graphs", "num_layers", "output_dim"))
def gine_forward(prepped, x_idx, edge_index, edge_attr, batch, *,
                 num_graphs, num_layers, output_dim):
    """x_idx: [N, 1] int32 node types; edge_index: [2, E] int32 (src, dst);
    edge_attr: [E] int32; batch: [N] int32 graph assignment."""
    n = x_idx.shape[0]
    d = prepped["W"].shape[-1]

    # Node axis padded to 128 (lane-dense contraction dim of adj/pool matmuls,
    # and a multiple of the 16-row bf16 sublane packing). Graph axis to 16.
    n_p = _round_up(max(n, 1), 128)
    b_p = _round_up(max(num_graphs, 1), 16)

    # Embedding lookups (gather glue outside the kernel).
    x_emb = jnp.take(prepped["node_emb"], x_idx.reshape(-1), axis=0)      # [n, d] bf16
    _ = jnp.take(prepped["edge_emb"], edge_attr, axis=0)  # computed as in reference, unused (GINConv ignores edge_attr)
    x_emb = _pad_axis(x_emb, 0, n_p)                                       # padded rows are zero

    # Dense adjacency with self-loops appended as edges (no eye add):
    #   agg[i] = x[i] + sum_{e: dst[e]==i} x[src[e]]
    self_idx = jnp.arange(n, dtype=edge_index.dtype)
    src = jnp.concatenate([edge_index[0], self_idx])
    dst = jnp.concatenate([edge_index[1], self_idx])
    adj = jnp.zeros((n_p, n_p), jnp.float32).at[dst, src].add(1.0)
    adj = adj.astype(jnp.bfloat16)   # exact for integer multiplicities <= 256

    # One-hot pooling matrix for global_add_pool (padded nodes/graphs -> 0).
    pool = (batch[None, :] == jnp.arange(num_graphs, dtype=batch.dtype)[:, None])
    pool = _pad_axis(_pad_axis(pool.astype(jnp.bfloat16), 1, n_p), 0, b_p)

    args = (adj, pool, x_emb, prepped["W"], prepped["B"])

    # VMEM budget from actual buffer bytes (+ margin), capped for v7x's 64 MiB.
    out_bytes = b_p * d * 4
    buf_bytes = sum(int(a.size) * a.dtype.itemsize for a in args) + out_bytes
    vmem_limit = int(min(max(2 * buf_bytes + (4 << 20), 16 << 20), 48 << 20))

    vmem = pl.BlockSpec(memory_space=pltpu.MemorySpace.VMEM)
    out_padded = pl.pallas_call(
        functools.partial(gine_kernel, num_layers),
        out_shape=jax.ShapeDtypeStruct((b_p, d), jnp.float32),
        in_specs=[vmem] * len(args),
        out_specs=vmem,
        compiler_params=pltpu.CompilerParams(vmem_limit_bytes=vmem_limit),
    )(*args)

    # Strip lane/sublane padding outside the kernel.
    return out_padded[:num_graphs, :output_dim]


if __name__ == "__main__":
    hidden_dim = 32
    num_layers = 3
    output_dim = 1          # -> input_dim=28, edge_dim=4
    num_nodes = 16
    num_edges = 40
    num_graphs = 2

    key = jax.random.PRNGKey(0)
    k_params, k_x, k_src, k_dst, k_ea = jax.random.split(key, 5)

    params = init_params(k_params, hidden_dim, num_layers, output_dim)
    prepped = prepare_params(params, num_layers)   # pad/cast/stack once, reused per call

    x_idx = jax.random.randint(k_x, (num_nodes, 1), 0, 28, dtype=jnp.int32)
    src = jax.random.randint(k_src, (num_edges,), 0, num_nodes, dtype=jnp.int32)
    dst = jax.random.randint(k_dst, (num_edges,), 0, num_nodes, dtype=jnp.int32)
    edge_index = jnp.stack([src, dst], axis=0)
    edge_attr = jax.random.randint(k_ea, (num_edges,), 0, 4, dtype=jnp.int32)
    # First half of nodes -> graph 0, second half -> graph 1.
    batch = (jnp.arange(num_nodes) >= num_nodes // 2).astype(jnp.int32)

    out = gine_forward(prepped, x_idx, edge_index, edge_attr, batch,
                       num_graphs=num_graphs, num_layers=num_layers,
                       output_dim=output_dim)
    jax.block_until_ready(out)
    assert out.shape == (num_graphs, output_dim)
    print("KERNEL_OK")
</pallas_src>

<mosaic_0001>
module attributes {stable_mosaic.version = 11 : i64} {
  func.func @gine_kernel(%arg0: memref<128x128xbf16, #tpu.memory_space<vmem>>, %arg1: memref<16x128xbf16, #tpu.memory_space<vmem>>, %arg2: memref<128x128xbf16, #tpu.memory_space<vmem>>, %arg3: memref<9x128x128xbf16, #tpu.memory_space<vmem>>, %arg4: memref<9x128xf32, #tpu.memory_space<vmem>>, %arg5: memref<16x128xf32, #tpu.memory_space<vmem>>) attributes {dimension_semantics = [], scalar_prefetch = 0 : i64, scratch_operands = 0 : i64, tpu.core_type = #tpu.core_type<tc>} {
    %c0 = arith.constant 0 : index
    %c0_0 = arith.constant 0 : index
    %0 = vector.load %arg2[%c0, %c0_0] : memref<128x128xbf16, #tpu.memory_space<vmem>>, vector<128x128xbf16>
    %c0_1 = arith.constant 0 : index
    %c0_2 = arith.constant 0 : index
    %1 = vector.load %arg0[%c0_1, %c0_2] : memref<128x128xbf16, #tpu.memory_space<vmem>>, vector<128x128xbf16>
    %cst = arith.constant dense<0.000000e+00> : vector<128x128xf32>
    %2 = tpu.matmul %1, %0, %cst {dimension_numbers = #tpu.dot_dimension_numbers<[1], [0], [0], [1], [0, 0, 1, 1], [], []>} : vector<128x128xbf16>, vector<128x128xbf16>, vector<128x128xf32> -> vector<128x128xf32>
    %3 = arith.truncf %2 : vector<128x128xf32> to vector<128x128xbf16>
    %c0_3 = arith.constant 0 : index
    %c0_4 = arith.constant 0 : index
    %c0_5 = arith.constant 0 : index
    %4 = vector.load %arg3[%c0_3, %c0_4, %c0_5] : memref<9x128x128xbf16, #tpu.memory_space<vmem>>, vector<1x128x128xbf16>
    %5 = vector.shape_cast %4 : vector<1x128x128xbf16> to vector<128x128xbf16>
    %cst_6 = arith.constant dense<0.000000e+00> : vector<128x128xf32>
    %6 = tpu.matmul %3, %5, %cst_6 {dimension_numbers = #tpu.dot_dimension_numbers<[1], [0], [0], [1], [0, 0, 1, 1], [], []>} : vector<128x128xbf16>, vector<128x128xbf16>, vector<128x128xf32> -> vector<128x128xf32>
    %c0_7 = arith.constant 0 : index
    %c0_8 = arith.constant 0 : index
    %7 = vector.load %arg4[%c0_7, %c0_8] : memref<9x128xf32, #tpu.memory_space<vmem>>, vector<1x128xf32>
    %8 = vector.broadcast %7 : vector<1x128xf32> to vector<128x128xf32>
    %9 = arith.addf %6, %8 : vector<128x128xf32>
    %cst_9 = arith.constant 0.000000e+00 : f32
    %10 = vector.broadcast %cst_9 : f32 to vector<128x128xf32>
    %11 = arith.maximumf %9, %10 : vector<128x128xf32>
    %12 = arith.truncf %11 : vector<128x128xf32> to vector<128x128xbf16>
    %c1 = arith.constant 1 : index
    %c0_10 = arith.constant 0 : index
    %c0_11 = arith.constant 0 : index
    %13 = vector.load %arg3[%c1, %c0_10, %c0_11] : memref<9x128x128xbf16, #tpu.memory_space<vmem>>, vector<1x128x128xbf16>
    %14 = vector.shape_cast %13 : vector<1x128x128xbf16> to vector<128x128xbf16>
    %cst_12 = arith.constant dense<0.000000e+00> : vector<128x128xf32>
    %15 = tpu.matmul %12, %14, %cst_12 {dimension_numbers = #tpu.dot_dimension_numbers<[1], [0], [0], [1], [0, 0, 1, 1], [], []>} : vector<128x128xbf16>, vector<128x128xbf16>, vector<128x128xf32> -> vector<128x128xf32>
    %c1_13 = arith.constant 1 : index
    %c0_14 = arith.constant 0 : index
    %16 = vector.load %arg4[%c1_13, %c0_14] : memref<9x128xf32, #tpu.memory_space<vmem>>, vector<1x128xf32>
    %17 = vector.broadcast %16 : vector<1x128xf32> to vector<128x128xf32>
    %18 = arith.addf %15, %17 : vector<128x128xf32>
    %19 = arith.truncf %18 : vector<128x128xf32> to vector<128x128xbf16>
    %cst_15 = arith.constant dense<0.000000e+00> : vector<128x128xf32>
    %20 = tpu.matmul %1, %19, %cst_15 {dimension_numbers = #tpu.dot_dimension_numbers<[1], [0], [0], [1], [0, 0, 1, 1], [], []>} : vector<128x128xbf16>, vector<128x128xbf16>, vector<128x128xf32> -> vector<128x128xf32>
    %21 = arith.truncf %20 : vector<128x128xf32> to vector<128x128xbf16>
    %c2 = arith.constant 2 : index
    %c0_16 = arith.constant 0 : index
    %c0_17 = arith.constant 0 : index
    %22 = vector.load %arg3[%c2, %c0_16, %c0_17] : memref<9x128x128xbf16, #tpu.memory_space<vmem>>, vector<1x128x128xbf16>
    %23 = vector.shape_cast %22 : vector<1x128x128xbf16> to vector<128x128xbf16>
    %cst_18 = arith.constant dense<0.000000e+00> : vector<128x128xf32>
    %24 = tpu.matmul %21, %23, %cst_18 {dimension_numbers = #tpu.dot_dimension_numbers<[1], [0], [0], [1], [0, 0, 1, 1], [], []>} : vector<128x128xbf16>, vector<128x128xbf16>, vector<128x128xf32> -> vector<128x128xf32>
    %c2_19 = arith.constant 2 : index
    %c0_20 = arith.constant 0 : index
    %25 = vector.load %arg4[%c2_19, %c0_20] : memref<9x128xf32, #tpu.memory_space<vmem>>, vector<1x128xf32>
    %26 = vector.broadcast %25 : vector<1x128xf32> to vector<128x128xf32>
    %27 = arith.addf %24, %26 : vector<128x128xf32>
    %cst_21 = arith.constant 0.000000e+00 : f32
    %28 = vector.broadcast %cst_21 : f32 to vector<128x128xf32>
    %29 = arith.maximumf %27, %28 : vector<128x128xf32>
    %30 = arith.truncf %29 : vector<128x128xf32> to vector<128x128xbf16>
    %c3 = arith.constant 3 : index
    %c0_22 = arith.constant 0 : index
    %c0_23 = arith.constant 0 : index
    %31 = vector.load %arg3[%c3, %c0_22, %c0_23] : memref<9x128x128xbf16, #tpu.memory_space<vmem>>, vector<1x128x128xbf16>
    %32 = vector.shape_cast %31 : vector<1x128x128xbf16> to vector<128x128xbf16>
    %cst_24 = arith.constant dense<0.000000e+00> : vector<128x128xf32>
    %33 = tpu.matmul %30, %32, %cst_24 {dimension_numbers = #tpu.dot_dimension_numbers<[1], [0], [0], [1], [0, 0, 1, 1], [], []>} : vector<128x128xbf16>, vector<128x128xbf16>, vector<128x128xf32> -> vector<128x128xf32>
    %c3_25 = arith.constant 3 : index
    %c0_26 = arith.constant 0 : index
    %34 = vector.load %arg4[%c3_25, %c0_26] : memref<9x128xf32, #tpu.memory_space<vmem>>, vector<1x128xf32>
    %35 = vector.broadcast %34 : vector<1x128xf32> to vector<128x128xf32>
    %36 = arith.addf %33, %35 : vector<128x128xf32>
    %37 = arith.truncf %36 : vector<128x128xf32> to vector<128x128xbf16>
    %cst_27 = arith.constant dense<0.000000e+00> : vector<128x128xf32>
    %38 = tpu.matmul %1, %37, %cst_27 {dimension_numbers = #tpu.dot_dimension_numbers<[1], [0], [0], [1], [0, 0, 1, 1], [], []>} : vector<128x128xbf16>, vector<128x128xbf16>, vector<128x128xf32> -> vector<128x128xf32>
    %39 = arith.truncf %38 : vector<128x128xf32> to vector<128x128xbf16>
    %c4 = arith.constant 4 : index
    %c0_28 = arith.constant 0 : index
    %c0_29 = arith.constant 0 : index
    %40 = vector.load %arg3[%c4, %c0_28, %c0_29] : memref<9x128x128xbf16, #tpu.memory_space<vmem>>, vector<1x128x128xbf16>
    %41 = vector.shape_cast %40 : vector<1x128x128xbf16> to vector<128x128xbf16>
    %cst_30 = arith.constant dense<0.000000e+00> : vector<128x128xf32>
    %42 = tpu.matmul %39, %41, %cst_30 {dimension_numbers = #tpu.dot_dimension_numbers<[1], [0], [0], [1], [0, 0, 1, 1], [], []>} : vector<128x128xbf16>, vector<128x128xbf16>, vector<128x128xf32> -> vector<128x128xf32>
    %c4_31 = arith.constant 4 : index
    %c0_32 = arith.constant 0 : index
    %43 = vector.load %arg4[%c4_31, %c0_32] : memref<9x128xf32, #tpu.memory_space<vmem>>, vector<1x128xf32>
    %44 = vector.broadcast %43 : vector<1x128xf32> to vector<128x128xf32>
    %45 = arith.addf %42, %44 : vector<128x128xf32>
    %cst_33 = arith.constant 0.000000e+00 : f32
    %46 = vector.broadcast %cst_33 : f32 to vector<128x128xf32>
    %47 = arith.maximumf %45, %46 : vector<128x128xf32>
    %48 = arith.truncf %47 : vector<128x128xf32> to vector<128x128xbf16>
    %c5 = arith.constant 5 : index
    %c0_34 = arith.constant 0 : index
    %c0_35 = arith.constant 0 : index
    %49 = vector.load %arg3[%c5, %c0_34, %c0_35] : memref<9x128x128xbf16, #tpu.memory_space<vmem>>, vector<1x128x128xbf16>
    %50 = vector.shape_cast %49 : vector<1x128x128xbf16> to vector<128x128xbf16>
    %cst_36 = arith.constant dense<0.000000e+00> : vector<128x128xf32>
    %51 = tpu.matmul %48, %50, %cst_36 {dimension_numbers = #tpu.dot_dimension_numbers<[1], [0], [0], [1], [0, 0, 1, 1], [], []>} : vector<128x128xbf16>, vector<128x128xbf16>, vector<128x128xf32> -> vector<128x128xf32>
    %c5_37 = arith.constant 5 : index
    %c0_38 = arith.constant 0 : index
    %52 = vector.load %arg4[%c5_37, %c0_38] : memref<9x128xf32, #tpu.memory_space<vmem>>, vector<1x128xf32>
    %53 = vector.broadcast %52 : vector<1x128xf32> to vector<128x128xf32>
    %54 = arith.addf %51, %53 : vector<128x128xf32>
    %55 = arith.truncf %54 : vector<128x128xf32> to vector<128x128xbf16>
    %c0_39 = arith.constant 0 : index
    %c0_40 = arith.constant 0 : index
    %56 = vector.load %arg1[%c0_39, %c0_40] : memref<16x128xbf16, #tpu.memory_space<vmem>>, vector<16x128xbf16>
    %cst_41 = arith.constant dense<0.000000e+00> : vector<16x128xf32>
    %57 = tpu.matmul %56, %55, %cst_41 {dimension_numbers = #tpu.dot_dimension_numbers<[1], [0], [0], [1], [0, 0, 1, 1], [], []>} : vector<16x128xbf16>, vector<128x128xbf16>, vector<16x128xf32> -> vector<16x128xf32>
    %58 = arith.truncf %57 : vector<16x128xf32> to vector<16x128xbf16>
    %c6 = arith.constant 6 : index
    %c0_42 = arith.constant 0 : index
    %c0_43 = arith.constant 0 : index
    %59 = vector.load %arg3[%c6, %c0_42, %c0_43] : memref<9x128x128xbf16, #tpu.memory_space<vmem>>, vector<1x128x128xbf16>
    %60 = vector.shape_cast %59 : vector<1x128x128xbf16> to vector<128x128xbf16>
    %cst_44 = arith.constant dense<0.000000e+00> : vector<16x128xf32>
    %61 = tpu.matmul %58, %60, %cst_44 {dimension_numbers = #tpu.dot_dimension_numbers<[1], [0], [0], [1], [0, 0, 1, 1], [], []>} : vector<16x128xbf16>, vector<128x128xbf16>, vector<16x128xf32> -> vector<16x128xf32>
    %c6_45 = arith.constant 6 : index
    %c0_46 = arith.constant 0 : index
    %62 = vector.load %arg4[%c6_45, %c0_46] : memref<9x128xf32, #tpu.memory_space<vmem>>, vector<1x128xf32>
    %63 = vector.broadcast %62 : vector<1x128xf32> to vector<16x128xf32>
    %64 = arith.addf %61, %63 : vector<16x128xf32>
    %cst_47 = arith.constant 0.000000e+00 : f32
    %65 = vector.broadcast %cst_47 : f32 to vector<16x128xf32>
    %66 = arith.maximumf %64, %65 : vector<16x128xf32>
    %67 = arith.truncf %66 : vector<16x128xf32> to vector<16x128xbf16>
    %c7 = arith.constant 7 : index
    %c0_48 = arith.constant 0 : index
    %c0_49 = arith.constant 0 : index
    %68 = vector.load %arg3[%c7, %c0_48, %c0_49] : memref<9x128x128xbf16, #tpu.memory_space<vmem>>, vector<1x128x128xbf16>
    %69 = vector.shape_cast %68 : vector<1x128x128xbf16> to vector<128x128xbf16>
    %cst_50 = arith.constant dense<0.000000e+00> : vector<16x128xf32>
    %70 = tpu.matmul %67, %69, %cst_50 {dimension_numbers = #tpu.dot_dimension_numbers<[1], [0], [0], [1], [0, 0, 1, 1], [], []>} : vector<16x128xbf16>, vector<128x128xbf16>, vector<16x128xf32> -> vector<16x128xf32>
    %c7_51 = arith.constant 7 : index
    %c0_52 = arith.constant 0 : index
    %71 = vector.load %arg4[%c7_51, %c0_52] : memref<9x128xf32, #tpu.memory_space<vmem>>, vector<1x128xf32>
    %72 = vector.broadcast %71 : vector<1x128xf32> to vector<16x128xf32>
    %73 = arith.addf %70, %72 : vector<16x128xf32>
    %cst_53 = arith.constant 0.000000e+00 : f32
    %74 = vector.broadcast %cst_53 : f32 to vector<16x128xf32>
    %75 = arith.maximumf %73, %74 : vector<16x128xf32>
    %76 = arith.truncf %75 : vector<16x128xf32> to vector<16x128xbf16>
    %c8 = arith.constant 8 : index
    %c0_54 = arith.constant 0 : index
    %c0_55 = arith.constant 0 : index
    %77 = vector.load %arg3[%c8, %c0_54, %c0_55] : memref<9x128x128xbf16, #tpu.memory_space<vmem>>, vector<1x128x128xbf16>
    %78 = vector.shape_cast %77 : vector<1x128x128xbf16> to vector<128x128xbf16>
    %cst_56 = arith.constant dense<0.000000e+00> : vector<16x128xf32>
    %79 = tpu.matmul %76, %78, %cst_56 {dimension_numbers = #tpu.dot_dimension_numbers<[1], [0], [0], [1], [0, 0, 1, 1], [], []>} : vector<16x128xbf16>, vector<128x128xbf16>, vector<16x128xf32> -> vector<16x128xf32>
    %c8_57 = arith.constant 8 : index
    %c0_58 = arith.constant 0 : index
    %80 = vector.load %arg4[%c8_57, %c0_58] : memref<9x128xf32, #tpu.memory_space<vmem>>, vector<1x128xf32>
    %81 = vector.broadcast %80 : vector<1x128xf32> to vector<16x128xf32>
    %82 = arith.addf %79, %81 : vector<16x128xf32>
    %c0_59 = arith.constant 0 : index
    %c0_60 = arith.constant 0 : index
    %83 = vector.load %arg5[%c0_59, %c0_60] : memref<16x128xf32, #tpu.memory_space<vmem>>, vector<16x128xf32>
    tpu.vector_store %arg5[%c0_59, %c0_60], %82 {strides = array<i32>} : memref<16x128xf32, #tpu.memory_space<vmem>>, vector<16x128xf32>,
    return
  }
}

</mosaic_0001>

<llo_original>
// kernel: gine_forward.1
$region0: #{gine_forward.1}
  #allocation0 [shape = 'u32[]', space=smem, size = 0x4, offset = 0x4, fixed_abs, tag = 'smem constant byte address 0x4 - core index']
  #allocation1 [shape = 'u32[144,128]{1,0:T(1,128)}', space=vmem, size = 0x12000, scoped, tag = 'internal scratch']
  %s0 = inlined_call_operand.vmem [shape: bf16[128,128], index: 0, kind: input, shape index: {}]
  %s1 = inlined_call_operand.vmem [shape: bf16[16,128], index: 1, kind: input, shape index: {}]
  %s2 = inlined_call_operand.vmem [shape: bf16[128,128], index: 2, kind: input, shape index: {}]
  %s3 = inlined_call_operand.vmem [shape: bf16[9,128,128], index: 3, kind: input, shape index: {}]
  %s4 = inlined_call_operand.vmem [shape: f32[9,128], index: 4, kind: input, shape index: {}]
  %s5 = inlined_call_operand.vmem [shape: f32[16,128], index: 5, kind: output, shape index: {}]
  %s6 = sld [smem:[#allocation0]]
  $region30: #{gine_forward.1} parent=0
    _
  %s8 = ssub.s32 1, %s6
  %s9 = scalar_select 0, %s8, %s6
  // Predicated region
  $region2: #{gine_forward.1} parent=0 // pred_check
    _
  $region3: #{gine_forward.1} parent=0 // pred_check_branch
    %11 = sbr.rel (0) target = $region5
  $region4: #{gine_forward.1} parent=0 // pred_region
    _
  $region5: #{gine_forward.1} parent=0 // pred_fallthru
    _
  // Predicated region
  $region6: #{gine_forward.1} parent=0 // pred_check
    _
  $region7: #{gine_forward.1} parent=0 // pred_check_branch
    %13 = sbr.rel (0) target = $region9
  $region8: #{gine_forward.1} parent=0 // pred_region
    _
  $region9: #{gine_forward.1} parent=0 // pred_fallthru
    _
  // Predicated region
  $region10: #{gine_forward.1} parent=0 // pred_check
    _
  $region11: #{gine_forward.1} parent=0 // pred_check_branch
    %15 = sbr.rel (0) target = $region13
  $region12: #{gine_forward.1} parent=0 // pred_region
    _
  $region13: #{gine_forward.1} parent=0 // pred_fallthru
    _
  // Predicated region
  $region14: #{gine_forward.1} parent=0 // pred_check
    _
  $region15: #{gine_forward.1} parent=0 // pred_check_branch
    %17 = sbr.rel (0) target = $region17
  $region16: #{gine_forward.1} parent=0 // pred_region
    _
  $region17: #{gine_forward.1} parent=0 // pred_fallthru
    _
  // Predicated region
  $region18: #{gine_forward.1} parent=0 // pred_check
    _
  $region19: #{gine_forward.1} parent=0 // pred_check_branch
    %19 = sbr.rel (0) target = $region21
  $region20: #{gine_forward.1} parent=0 // pred_region
    _
  $region21: #{gine_forward.1} parent=0 // pred_fallthru
    _
  %v21 = vld [vmem:[%s2] sm:$0xf]
  %v22 = vld [vmem:[%s2 + $0x4] sm:$0xf]
  %v23 = vld [vmem:[%s2 + $0x8] sm:$0xf]
  %v24 = vld [vmem:[%s2 + $0xc] sm:$0xf]
  %v25 = vld [vmem:[%s2 + $0x10] sm:$0xf]
  %v26 = vld [vmem:[%s2 + $0x14] sm:$0xf]
  %v27 = vld [vmem:[%s2 + $0x18] sm:$0xf]
  %v28 = vld [vmem:[%s2 + $0x1c] sm:$0xf]
  %v29 = vld [vmem:[%s2 + $0x20] sm:$0xf]
  %v30 = vld [vmem:[%s2 + $0x24] sm:$0xf]
  %v31 = vld [vmem:[%s2 + $0x28] sm:$0xf]
  %v32 = vld [vmem:[%s2 + $0x2c] sm:$0xf]
  %v33 = vld [vmem:[%s2 + $0x30] sm:$0xf]
  %v34 = vld [vmem:[%s2 + $0x34] sm:$0xf]
  %v35 = vld [vmem:[%s2 + $0x38] sm:$0xf]
  %v36 = vld [vmem:[%s2 + $0x3c] sm:$0xf]
  %v37 = vld [vmem:[%s0] sm:$0xf]
  %v38 = vld [vmem:[%s0 + $0x4] sm:$0xf]
  %v39 = vld [vmem:[%s0 + $0x8] sm:$0xf]
  %v40 = vld [vmem:[%s0 + $0xc] sm:$0xf]
  %v41 = vld [vmem:[%s0 + $0x10] sm:$0xf]
  %v42 = vld [vmem:[%s0 + $0x14] sm:$0xf]
  %v43 = vld [vmem:[%s0 + $0x18] sm:$0xf]
  %v44 = vld [vmem:[%s0 + $0x1c] sm:$0xf]
  %v45 = vld [vmem:[%s0 + $0x20] sm:$0xf]
  %v46 = vld [vmem:[%s0 + $0x24] sm:$0xf]
  %v47 = vld [vmem:[%s0 + $0x28] sm:$0xf]
  %v48 = vld [vmem:[%s0 + $0x2c] sm:$0xf]
  %v49 = vld [vmem:[%s0 + $0x30] sm:$0xf]
  %v50 = vld [vmem:[%s0 + $0x34] sm:$0xf]
  %v51 = vld [vmem:[%s0 + $0x38] sm:$0xf]
  %v52 = vld [vmem:[%s0 + $0x3c] sm:$0xf]
  %v69 = vunpack.c.l.b16 %v37
  %v70 = vunpack.c.l.b16 %v38
  %v71 = vunpack.c.l.b16 %v39
  %v72 = vunpack.c.l.b16 %v40
  %v73 = vunpack.c.l.b16 %v41
  %v74 = vunpack.c.l.b16 %v42
  %v75 = vunpack.c.l.b16 %v43
  %v76 = vunpack.c.l.b16 %v44
  %v77 = vunpack.c.l.b16 %v45
  %v78 = vunpack.c.l.b16 %v46
  %v79 = vunpack.c.l.b16 %v47
  %v80 = vunpack.c.l.b16 %v48
  %v81 = vunpack.c.l.b16 %v49
  %v82 = vunpack.c.l.b16 %v50
  %v83 = vunpack.c.l.b16 %v51
  %v84 = vunpack.c.l.b16 %v52
  %v85 = vpack.c.b16 %v70, %v69
  %v86 = vpack.c.b16 %v72, %v71
  %v87 = vpack.c.b16 %v74, %v73
  %v88 = vpack.c.b16 %v76, %v75
  %v89 = vpack.c.b16 %v78, %v77
  %v90 = vpack.c.b16 %v80, %v79
  %v91 = vpack.c.b16 %v82, %v81
  %v92 = vpack.c.b16 %v84, %v83
  %v117 = vunpack.c.l.b16 %v21
  %v118 = vunpack.c.l.b16 %v22
  %v119 = vunpack.c.l.b16 %v23
  %v120 = vunpack.c.l.b16 %v24
  %v121 = vunpack.c.l.b16 %v25
  %v122 = vunpack.c.l.b16 %v26
  %v123 = vunpack.c.l.b16 %v27
  %v124 = vunpack.c.l.b16 %v28
  %v125 = vunpack.c.l.b16 %v29
  %v126 = vunpack.c.l.b16 %v30
  %v127 = vunpack.c.l.b16 %v31
  %v128 = vunpack.c.l.b16 %v32
  %v129 = vunpack.c.l.b16 %v33
  %v130 = vunpack.c.l.b16 %v34
  %v131 = vunpack.c.l.b16 %v35
  %v132 = vunpack.c.l.b16 %v36
  %v133 = vpack.c.b16 %v118, %v117
  %v134 = vpack.c.b16 %v120, %v119
  %v135 = vpack.c.b16 %v122, %v121
  %v136 = vpack.c.b16 %v124, %v123
  %v137 = vpack.c.b16 %v126, %v125
  %v138 = vpack.c.b16 %v128, %v127
  %v139 = vpack.c.b16 %v130, %v129
  %v140 = vpack.c.b16 %v132, %v131
  %149 = vmatprep.subr.bf16.mxu0 0
  %150 = vmatpush1.bf16.msra.mxu0 %v133
  %151 = vmatprep.subr.bf16.mxu0 0
  %152 = vmatpush1.bf16.msra.mxu0 %v134
  %153 = vmatprep.subr.bf16.mxu0 0
  %154 = vmatpush1.bf16.msra.mxu0 %v135
  %155 = vmatprep.subr.bf16.mxu0 0
  %156 = vmatpush1.bf16.msra.mxu0 %v136
  %157 = vmatprep.subr.bf16.mxu0 0
  %158 = vmatpush1.bf16.msra.mxu0 %v137
  %159 = vmatprep.subr.bf16.mxu0 0
  %160 = vmatpush1.bf16.msra.mxu0 %v138
  %161 = vmatprep.subr.bf16.mxu0 0
  %162 = vmatpush1.bf16.msra.mxu0 %v139
  %163 = vmatprep.subr.bf16.mxu0 0
  %164 = vmatpush1.bf16.msra.mxu0 %v140
  %165 = vmatprep.subr.bf16.mxu0 0
  %166 = vmatpush1.bf16.msra.mxu0 0
  %167 = vmatprep.subr.bf16.mxu0 0
  %168 = vmatpush1.bf16.msra.mxu0 0
  %169 = vmatprep.subr.bf16.mxu0 0
  %170 = vmatpush1.bf16.msra.mxu0 0
  %171 = vmatprep.subr.bf16.mxu0 0
  %172 = vmatpush1.bf16.msra.mxu0 0
  %173 = vmatprep.subr.bf16.mxu0 0
  %174 = vmatpush1.bf16.msra.mxu0 0
  %175 = vmatprep.subr.bf16.mxu0 0
  %176 = vmatpush1.bf16.msra.mxu0 0
  %177 = vmatprep.subr.bf16.mxu0 0
  %178 = vmatpush1.bf16.msra.mxu0 0
  %179 = vmatprep.subr.bf16.mxu0 0
  %180 = vmatpush1.bf16.msra.mxu0 0
  %181 = vmatprep.mubr.bf16.mxu0 0
  %182 = vmatmul.mubr.bf16.gmra.mrb[0].mxu0 %v85
  %v183 = vpop.f32.mrb[0].mxu0
  %v184 = vadd.f32 0.0, %v183
  %v185 = vpop.f32.mrb[0].mxu0
  %v186 = vpop.f32.mrb[0].mxu0
  %v187 = vadd.f32 0.0, %v186
  %v188 = vpop.f32.mrb[0].mxu0
  %189 = vmatprep.mubr.bf16.mxu0 0
  %190 = vmatmul.mubr.bf16.gmra.mrb[0].mxu0 %v86
  %v191 = vpop.f32.mrb[0].mxu0
  %v192 = vadd.f32 0.0, %v191
  %v193 = vpop.f32.mrb[0].mxu0
  %v194 = vpop.f32.mrb[0].mxu0
  %v195 = vadd.f32 0.0, %v194
  %v196 = vpop.f32.mrb[0].mxu0
  %197 = vmatprep.mubr.bf16.mxu0 0
  %198 = vmatmul.mubr.bf16.gmra.mrb[0].mxu0 %v87
  %v199 = vpop.f32.mrb[0].mxu0
  %v200 = vadd.f32 0.0, %v199
  %v201 = vpop.f32.mrb[0].mxu0
  %v202 = vpop.f32.mrb[0].mxu0
  %v203 = vadd.f32 0.0, %v202
  %v204 = vpop.f32.mrb[0].mxu0
  %205 = vmatprep.mubr.bf16.mxu0 0
  %206 = vmatmul.mubr.bf16.gmra.mrb[0].mxu0 %v88
  %v207 = vpop.f32.mrb[0].mxu0
  %v208 = vadd.f32 0.0, %v207
  %v209 = vpop.f32.mrb[0].mxu0
  %v210 = vpop.f32.mrb[0].mxu0
  %v211 = vadd.f32 0.0, %v210
  %v212 = vpop.f32.mrb[0].mxu0
  %213 = vmatprep.mubr.bf16.mxu0 0
  %214 = vmatmul.mubr.bf16.gmra.mrb[0].mxu0 %v89
  %v215 = vpop.f32.mrb[0].mxu0
  %v216 = vadd.f32 0.0, %v215
  %v217 = vpop.f32.mrb[0].mxu0
  %v218 = vpop.f32.mrb[0].mxu0
  %v219 = vadd.f32 0.0, %v218
  %v220 = vpop.f32.mrb[0].mxu0
  %221 = vmatprep.mubr.bf16.mxu0 0
  %222 = vmatmul.mubr.bf16.gmra.mrb[0].mxu0 %v90
  %v223 = vpop.f32.mrb[0].mxu0
  %v224 = vadd.f32 0.0, %v223
  %v225 = vpop.f32.mrb[0].mxu0
  %v226 = vpop.f32.mrb[0].mxu0
  %v227 = vadd.f32 0.0, %v226
  %v228 = vpop.f32.mrb[0].mxu0
  %229 = vmatprep.mubr.bf16.mxu0 0
  %230 = vmatmul.mubr.bf16.gmra.mrb[0].mxu0 %v91
  %v231 = vpop.f32.mrb[0].mxu0
  %v232 = vadd.f32 0.0, %v231
  %v233 = vpop.f32.mrb[0].mxu0
  %v234 = vpop.f32.mrb[0].mxu0
  %v235 = vadd.f32 0.0, %v234
  %v236 = vpop.f32.mrb[0].mxu0
  %237 = vmatprep.mubr.bf16.mxu0 0
  %238 = vmatmul.mubr.bf16.gmra.mrb[0].mxu0 %v92
  %v239 = vpop.f32.mrb[0].mxu0
  %v240 = vadd.f32 0.0, %v239
  %v241 = vpop.f32.mrb[0].mxu0
  %v242 = vpop.f32.mrb[0].mxu0
  %v243 = vadd.f32 0.0, %v242
  %v244 = vpop.f32.mrb[0].mxu0
  %245 = vdwg.mxu0
  %v246 = vpack.c.bf16 %v187, %v184
  %v247 = vpack.c.bf16 %v195, %v192
  %v248 = vpack.c.bf16 %v203, %v200
  %v249 = vpack.c.bf16 %v211, %v208
  %v250 = vpack.c.bf16 %v219, %v216
  %v251 = vpack.c.bf16 %v227, %v224
  %v252 = vpack.c.bf16 %v235, %v232
  %v253 = vpack.c.bf16 %v243, %v240
  %v254 = vld [vmem:[%s3] sm:$0xf]
  %v255 = vld [vmem:[%s3 + $0x4] sm:$0xf]
  %v256 = vld [vmem:[%s3 + $0x8] sm:$0xf]
  %v257 = vld [vmem:[%s3 + $0xc] sm:$0xf]
  %v258 = vld [vmem:[%s3 + $0x10] sm:$0xf]
  %v259 = vld [vmem:[%s3 + $0x14] sm:$0xf]
  %v260 = vld [vmem:[%s3 + $0x18] sm:$0xf]
  %v261 = vld [vmem:[%s3 + $0x1c] sm:$0xf]
  %v262 = vld [vmem:[%s3 + $0x20] sm:$0xf]
  %v263 = vld [vmem:[%s3 + $0x24] sm:$0xf]
  %v264 = vld [vmem:[%s3 + $0x28] sm:$0xf]
  %v265 = vld [vmem:[%s3 + $0x2c] sm:$0xf]
  %v266 = vld [vmem:[%s3 + $0x30] sm:$0xf]
  %v267 = vld [vmem:[%s3 + $0x34] sm:$0xf]
  %v268 = vld [vmem:[%s3 + $0x38] sm:$0xf]
  %v269 = vld [vmem:[%s3 + $0x3c] sm:$0xf]
  %v270 = vld [vmem:[%s4] sm:$0x1]
  %v271 = vlaneseq
  %v272 = vshrl.u32 %v271, 7
  %v273 = vsub.s32 0, %v272
  %v274 = vrot.slane %v270, %v273
  %v291 = vunpack.c.l.b16 %v254
  %v292 = vunpack.c.l.b16 %v255
  %v293 = vunpack.c.l.b16 %v256
  %v294 = vunpack.c.l.b16 %v257
  %v295 = vunpack.c.l.b16 %v258
  %v296 = vunpack.c.l.b16 %v259
  %v297 = vunpack.c.l.b16 %v260
  %v298 = vunpack.c.l.b16 %v261
  %v299 = vunpack.c.l.b16 %v262
  %v300 = vunpack.c.l.b16 %v263
  %v301 = vunpack.c.l.b16 %v264
  %v302 = vunpack.c.l.b16 %v265
  %v303 = vunpack.c.l.b16 %v266
  %v304 = vunpack.c.l.b16 %v267
  %v305 = vunpack.c.l.b16 %v268
  %v306 = vunpack.c.l.b16 %v269
  %v307 = vpack.c.b16 %v292, %v291
  %v308 = vpack.c.b16 %v294, %v293
  %v309 = vpack.c.b16 %v296, %v295
  %v310 = vpack.c.b16 %v298, %v297
  %v311 = vpack.c.b16 %v300, %v299
  %v312 = vpack.c.b16 %v302, %v301
  %v313 = vpack.c.b16 %v304, %v303
  %v314 = vpack.c.b16 %v306, %v305
  %323 = vmatprep.subr.bf16.mxu0 0
  %324 = vmatpush1.bf16.msra.mxu0 %v307
  %325 = vmatprep.subr.bf16.mxu0 0
  %326 = vmatpush1.bf16.msra.mxu0 %v308
  %327 = vmatprep.subr.bf16.mxu0 0
  %328 = vmatpush1.bf16.msra.mxu0 %v309
  %329 = vmatprep.subr.bf16.mxu0 0
  %330 = vmatpush1.bf16.msra.mxu0 %v310
  %331 = vmatprep.subr.bf16.mxu0 0
  %332 = vmatpush1.bf16.msra.mxu0 %v311
  %333 = vmatprep.subr.bf16.mxu0 0
  %334 = vmatpush1.bf16.msra.mxu0 %v312
  %335 = vmatprep.subr.bf16.mxu0 0
  %336 = vmatpush1.bf16.msra.mxu0 %v313
  %337 = vmatprep.subr.bf16.mxu0 0
  %338 = vmatpush1.bf16.msra.mxu0 %v314
  %339 = vmatprep.subr.bf16.mxu0 0
  %340 = vmatpush1.bf16.msra.mxu0 0
  %341 = vmatprep.subr.bf16.mxu0 0
  %342 = vmatpush1.bf16.msra.mxu0 0
  %343 = vmatprep.subr.bf16.mxu0 0
  %344 = vmatpush1.bf16.msra.mxu0 0
  %345 = vmatprep.subr.bf16.mxu0 0
  %346 = vmatpush1.bf16.msra.mxu0 0
  %347 = vmatprep.subr.bf16.mxu0 0
  %348 = vmatpush1.bf16.msra.mxu0 0
  %349 = vmatprep.subr.bf16.mxu0 0
  %350 = vmatpush1.bf16.msra.mxu0 0
  %351 = vmatprep.subr.bf16.mxu0 0
  %352 = vmatpush1.bf16.msra.mxu0 0
  %353 = vmatprep.subr.bf16.mxu0 0
  %354 = vmatpush1.bf16.msra.mxu0 0
  %355 = vmatprep.mubr.bf16.mxu0 0
  %356 = vmatmul.mubr.bf16.gmra.mrb[0].mxu0 %v246
  %v357 = vpop.f32.mrb[0].mxu0
  %v358 = vadd.f32 %v274, %v357
  %v359 = vpop.f32.mrb[0].mxu0
  %v360 = vpop.f32.mrb[0].mxu0
  %v361 = vadd.f32 %v274, %v360
  %v362 = vpop.f32.mrb[0].mxu0
  %363 = vmatprep.mubr.bf16.mxu0 0
  %364 = vmatmul.mubr.bf16.gmra.mrb[0].mxu0 %v247
  %v365 = vpop.f32.mrb[0].mxu0
  %v366 = vadd.f32 %v274, %v365
  %v367 = vpop.f32.mrb[0].mxu0
  %v368 = vpop.f32.mrb[0].mxu0
  %v369 = vadd.f32 %v274, %v368
  %v370 = vpop.f32.mrb[0].mxu0
  %371 = vmatprep.mubr.bf16.mxu0 0
  %372 = vmatmul.mubr.bf16.gmra.mrb[0].mxu0 %v248
  %v373 = vpop.f32.mrb[0].mxu0
  %v374 = vadd.f32 %v274, %v373
  %v375 = vpop.f32.mrb[0].mxu0
  %v376 = vpop.f32.mrb[0].mxu0
  %v377 = vadd.f32 %v274, %v376
  %v378 = vpop.f32.mrb[0].mxu0
  %379 = vmatprep.mubr.bf16.mxu0 0
  %380 = vmatmul.mubr.bf16.gmra.mrb[0].mxu0 %v249
  %v381 = vpop.f32.mrb[0].mxu0
  %v382 = vadd.f32 %v274, %v381
  %v383 = vpop.f32.mrb[0].mxu0
  %v384 = vpop.f32.mrb[0].mxu0
  %v385 = vadd.f32 %v274, %v384
  %v386 = vpop.f32.mrb[0].mxu0
  %387 = vmatprep.mubr.bf16.mxu0 0
  %388 = vmatmul.mubr.bf16.gmra.mrb[0].mxu0 %v250
  %v389 = vpop.f32.mrb[0].mxu0
  %v390 = vadd.f32 %v274, %v389
  %v391 = vpop.f32.mrb[0].mxu0
  %v392 = vpop.f32.mrb[0].mxu0
  %v393 = vadd.f32 %v274, %v392
  %v394 = vpop.f32.mrb[0].mxu0
  %395 = vmatprep.mubr.bf16.mxu0 0
  %396 = vmatmul.mubr.bf16.gmra.mrb[0].mxu0 %v251
  %v397 = vpop.f32.mrb[0].mxu0
  %v398 = vadd.f32 %v274, %v397
  %v399 = vpop.f32.mrb[0].mxu0
  %v400 = vpop.f32.mrb[0].mxu0
  %v401 = vadd.f32 %v274, %v400
  %v402 = vpop.f32.mrb[0].mxu0
  %403 = vmatprep.mubr.bf16.mxu0 0
  %404 = vmatmul.mubr.bf16.gmra.mrb[0].mxu0 %v252
  %v405 = vpop.f32.mrb[0].mxu0
  %v406 = vadd.f32 %v274, %v405
  %v407 = vpop.f32.mrb[0].mxu0
  %v408 = vpop.f32.mrb[0].mxu0
  %v409 = vadd.f32 %v274, %v408
  %v410 = vpop.f32.mrb[0].mxu0
  %411 = vmatprep.mubr.bf16.mxu0 0
  %412 = vmatmul.mubr.bf16.gmra.mrb[0].mxu0 %v253
  %v413 = vpop.f32.mrb[0].mxu0
  %v414 = vadd.f32 %v274, %v413
  %v415 = vpop.f32.mrb[0].mxu0
  %v416 = vpop.f32.mrb[0].mxu0
  %v417 = vadd.f32 %v274, %v416
  %v418 = vpop.f32.mrb[0].mxu0
  %419 = vdwg.mxu0
  %v420 = vmax.f32 %v358, 0.0
  %v421 = vmax.f32 %v361, 0.0
  %v422 = vmax.f32 %v366, 0.0
  %v423 = vmax.f32 %v369, 0.0
  %v424 = vmax.f32 %v374, 0.0
  %v425 = vmax.f32 %v377, 0.0
  %v426 = vmax.f32 %v382, 0.0
  %v427 = vmax.f32 %v385, 0.0
  %v428 = vmax.f32 %v390, 0.0
  %v429 = vmax.f32 %v393, 0.0
  %v430 = vmax.f32 %v398, 0.0
  %v431 = vmax.f32 %v401, 0.0
  %v432 = vmax.f32 %v406, 0.0
  %v433 = vmax.f32 %v409, 0.0
  %v434 = vmax.f32 %v414, 0.0
  %v435 = vmax.f32 %v417, 0.0
  %v436 = vpack.c.bf16 %v421, %v420
  %v437 = vpack.c.bf16 %v423, %v422
  %v438 = vpack.c.bf16 %v425, %v424
  %v439 = vpack.c.bf16 %v427, %v426
  %v440 = vpack.c.bf16 %v429, %v428
  %v441 = vpack.c.bf16 %v431, %v430
  %v442 = vpack.c.bf16 %v433, %v432
  %v443 = vpack.c.bf16 %v435, %v434
  %s444 = scalar_lea.vmem %s3, 64
  %v445 = vld [vmem:[%s444] sm:$0xf]
  %v446 = vld [vmem:[%s444 + $0x4] sm:$0xf]
  %v447 = vld [vmem:[%s444 + $0x8] sm:$0xf]
  %v448 = vld [vmem:[%s444 + $0xc] sm:$0xf]
  %v449 = vld [vmem:[%s444 + $0x10] sm:$0xf]
  %v450 = vld [vmem:[%s444 + $0x14] sm:$0xf]
  %v451 = vld [vmem:[%s444 + $0x18] sm:$0xf]
  %v452 = vld [vmem:[%s444 + $0x1c] sm:$0xf]
  %v453 = vld [vmem:[%s444 + $0x20] sm:$0xf]
  %v454 = vld [vmem:[%s444 + $0x24] sm:$0xf]
  %v455 = vld [vmem:[%s444 + $0x28] sm:$0xf]
  %v456 = vld [vmem:[%s444 + $0x2c] sm:$0xf]
  %v457 = vld [vmem:[%s444 + $0x30] sm:$0xf]
  %v458 = vld [vmem:[%s444 + $0x34] sm:$0xf]
  %v459 = vld [vmem:[%s444 + $0x38] sm:$0xf]
  %v460 = vld [vmem:[%s444 + $0x3c] sm:$0xf]
  %v461 = vld [vmem:[%s4 + $0x1] sm:$0x1]
  %v462 = vlaneseq
  %v463 = vshrl.u32 %v462, 7
  %v464 = vsub.s32 0, %v463
  %v465 = vrot.slane %v461, %v464
  %v482 = vunpack.c.l.b16 %v445
  %v483 = vunpack.c.l.b16 %v446
  %v484 = vunpack.c.l.b16 %v447
  %v485 = vunpack.c.l.b16 %v448
  %v486 = vunpack.c.l.b16 %v449
  %v487 = vunpack.c.l.b16 %v450
  %v488 = vunpack.c.l.b16 %v451
  %v489 = vunpack.c.l.b16 %v452
  %v490 = vunpack.c.l.b16 %v453
  %v491 = vunpack.c.l.b16 %v454
  %v492 = vunpack.c.l.b16 %v455
  %v493 = vunpack.c.l.b16 %v456
  %v494 = vunpack.c.l.b16 %v457
  %v495 = vunpack.c.l.b16 %v458
  %v496 = vunpack.c.l.b16 %v459
  %v497 = vunpack.c.l.b16 %v460
  %v498 = vpack.c.b16 %v483, %v482
  %v499 = vpack.c.b16 %v485, %v484
  %v500 = vpack.c.b16 %v487, %v486
  %v501 = vpack.c.b16 %v489, %v488
  %v502 = vpack.c.b16 %v491, %v490
  %v503 = vpack.c.b16 %v493, %v492
  %v504 = vpack.c.b16 %v495, %v494
  %v505 = vpack.c.b16 %v497, %v496
  %514 = vmatprep.subr.bf16.mxu0 0
  %515 = vmatpush1.bf16.msra.mxu0 %v498
  %516 = vmatprep.subr.bf16.mxu0 0
  %517 = vmatpush1.bf16.msra.mxu0 %v499
  %518 = vmatprep.subr.bf16.mxu0 0
  %519 = vmatpush1.bf16.msra.mxu0 %v500
  %520 = vmatprep.subr.bf16.mxu0 0
  %521 = vmatpush1.bf16.msra.mxu0 %v501
  %522 = vmatprep.subr.bf16.mxu0 0
  %523 = vmatpush1.bf16.msra.mxu0 %v502
  %524 = vmatprep.subr.bf16.mxu0 0
  %525 = vmatpush1.bf16.msra.mxu0 %v503
  %526 = vmatprep.subr.bf16.mxu0 0
  %527 = vmatpush1.bf16.msra.mxu0 %v504
  %528 = vmatprep.subr.bf16.mxu0 0
  %529 = vmatpush1.bf16.msra.mxu0 %v505
  %530 = vmatprep.subr.bf16.mxu0 0
  %531 = vmatpush1.bf16.msra.mxu0 0
  %532 = vmatprep.subr.bf16.mxu0 0
  %533 = vmatpush1.bf16.msra.mxu0 0
  %534 = vmatprep.subr.bf16.mxu0 0
  %535 = vmatpush1.bf16.msra.mxu0 0
  %536 = vmatprep.subr.bf16.mxu0 0
  %537 = vmatpush1.bf16.msra.mxu0 0
  %538 = vmatprep.subr.bf16.mxu0 0
  %539 = vmatpush1.bf16.msra.mxu0 0
  %540 = vmatprep.subr.bf16.mxu0 0
  %541 = vmatpush1.bf16.msra.mxu0 0
  %542 = vmatprep.subr.bf16.mxu0 0
  %543 = vmatpush1.bf16.msra.mxu0 0
  %544 = vmatprep.subr.bf16.mxu0 0
  %545 = vmatpush1.bf16.msra.mxu0 0
  %546 = vmatprep.mubr.bf16.mxu0 0
  %547 = vmatmul.mubr.bf16.gmra.mrb[0].mxu0 %v436
  %v548 = vpop.f32.mrb[0].mxu0
  %v549 = vadd.f32 %v465, %v548
  %v550 = vpop.f32.mrb[0].mxu0
  %v551 = vpop.f32.mrb[0].mxu0
  %v552 = vadd.f32 %v465, %v551
  %v553 = vpop.f32.mrb[0].mxu0
  %554 = vmatprep.mubr.bf16.mxu0 0
  %555 = vmatmul.mubr.bf16.gmra.mrb[0].mxu0 %v437
  %v556 = vpop.f32.mrb[0].mxu0
  %v557 = vadd.f32 %v465, %v556
  %v558 = vpop.f32.mrb[0].mxu0
  %v559 = vpop.f32.mrb[0].mxu0
  %v560 = vadd.f32 %v465, %v559
  %v561 = vpop.f32.mrb[0].mxu0
  %562 = vmatprep.mubr.bf16.mxu0 0
  %563 = vmatmul.mubr.bf16.gmra.mrb[0].mxu0 %v438
  %v564 = vpop.f32.mrb[0].mxu0
  %v565 = vadd.f32 %v465, %v564
  %v566 = vpop.f32.mrb[0].mxu0
  %v567 = vpop.f32.mrb[0].mxu0
  %v568 = vadd.f32 %v465, %v567
  %v569 = vpop.f32.mrb[0].mxu0
  %570 = vmatprep.mubr.bf16.mxu0 0
  %571 = vmatmul.mubr.bf16.gmra.mrb[0].mxu0 %v439
  %v572 = vpop.f32.mrb[0].mxu0
  %v573 = vadd.f32 %v465, %v572
  %v574 = vpop.f32.mrb[0].mxu0
  %v575 = vpop.f32.mrb[0].mxu0
  %v576 = vadd.f32 %v465, %v575
  %v577 = vpop.f32.mrb[0].mxu0
  %578 = vmatprep.mubr.bf16.mxu0 0
  %579 = vmatmul.mubr.bf16.gmra.mrb[0].mxu0 %v440
  %v580 = vpop.f32.mrb[0].mxu0
  %v581 = vadd.f32 %v465, %v580
  %v582 = vpop.f32.mrb[0].mxu0
  %v583 = vpop.f32.mrb[0].mxu0
  %v584 = vadd.f32 %v465, %v583
  %v585 = vpop.f32.mrb[0].mxu0
  %586 = vmatprep.mubr.bf16.mxu0 0
  %587 = vmatmul.mubr.bf16.gmra.mrb[0].mxu0 %v441
  %v588 = vpop.f32.mrb[0].mxu0
  %v589 = vadd.f32 %v465, %v588
  %v590 = vpop.f32.mrb[0].mxu0
  %v591 = vpop.f32.mrb[0].mxu0
  %v592 = vadd.f32 %v465, %v591
  %v593 = vpop.f32.mrb[0].mxu0
  %594 = vmatprep.mubr.bf16.mxu0 0
  %595 = vmatmul.mubr.bf16.gmra.mrb[0].mxu0 %v442
  %v596 = vpop.f32.mrb[0].mxu0
  %v597 = vadd.f32 %v465, %v596
  %v598 = vpop.f32.mrb[0].mxu0
  %v599 = vpop.f32.mrb[0].mxu0
  %v600 = vadd.f32 %v465, %v599
  %v601 = vpop.f32.mrb[0].mxu0
  %602 = vmatprep.mubr.bf16.mxu0 0
  %603 = vmatmul.mubr.bf16.gmra.mrb[0].mxu0 %v443
  %v604 = vpop.f32.mrb[0].mxu0
  %v605 = vadd.f32 %v465, %v604
  %v606 = vpop.f32.mrb[0].mxu0
  %v607 = vpop.f32.mrb[0].mxu0
  %v608 = vadd.f32 %v465, %v607
  %v609 = vpop.f32.mrb[0].mxu0
  %610 = vdwg.mxu0
  %v611 = vpack.c.bf16 %v552, %v549
  %v612 = vpack.c.bf16 %v560, %v557
  %v613 = vpack.c.bf16 %v568, %v565
  %v614 = vpack.c.bf16 %v576, %v573
  %v615 = vpack.c.bf16 %v584, %v581
  %v616 = vpack.c.bf16 %v592, %v589
  %v617 = vpack.c.bf16 %v600, %v597
  %v618 = vpack.c.bf16 %v608, %v605
  %619 = vmatprep.subr.bf16.mxu0 0
  %620 = vmatpush1.bf16.msra.mxu0 %v611
  %621 = vmatprep.subr.bf16.mxu0 0
  %622 = vmatpush1.bf16.msra.mxu0 %v612
  %623 = vmatprep.subr.bf16.mxu0 0
  %624 = vmatpush1.bf16.msra.mxu0 %v613
  %625 = vmatprep.subr.bf16.mxu0 0
  %626 = vmatpush1.bf16.msra.mxu0 %v614
  %627 = vmatprep.subr.bf16.mxu0 0
  %628 = vmatpush1.bf16.msra.mxu0 %v615
  %629 = vmatprep.subr.bf16.mxu0 0
  %630 = vmatpush1.bf16.msra.mxu0 %v616
  %631 = vmatprep.subr.bf16.mxu0 0
  %632 = vmatpush1.bf16.msra.mxu0 %v617
  %633 = vmatprep.subr.bf16.mxu0 0
  %634 = vmatpush1.bf16.msra.mxu0 %v618
  %635 = vmatprep.subr.bf16.mxu0 0
  %636 = vmatpush1.bf16.msra.mxu0 0
  %637 = vmatprep.subr.bf16.mxu0 0
  %638 = vmatpush1.bf16.msra.mxu0 0
  %639 = vmatprep.subr.bf16.mxu0 0
  %640 = vmatpush1.bf16.msra.mxu0 0
  %641 = vmatprep.subr.bf16.mxu0 0
  %642 = vmatpush1.bf16.msra.mxu0 0
  %643 = vmatprep.subr.bf16.mxu0 0
  %644 = vmatpush1.bf16.msra.mxu0 0
  %645 = vmatprep.subr.bf16.mxu0 0
  %646 = vmatpush1.bf16.msra.mxu0 0
  %647 = vmatprep.subr.bf16.mxu0 0
  %648 = vmatpush1.bf16.msra.mxu0 0
  %649 = vmatprep.subr.bf16.mxu0 0
  %650 = vmatpush1.bf16.msra.mxu0 0
  %651 = vmatprep.mubr.bf16.mxu0 0
  %652 = vmatmul.mubr.bf16.gmra.mrb[0].mxu0 %v85
  %v653 = vpop.f32.mrb[0].mxu0
  %v654 = vadd.f32 0.0, %v653
  %v655 = vpop.f32.mrb[0].mxu0
  %v656 = vpop.f32.mrb[0].mxu0
  %v657 = vadd.f32 0.0, %v656
  %v658 = vpop.f32.mrb[0].mxu0
  %659 = vmatprep.mubr.bf16.mxu0 0
  %660 = vmatmul.mubr.bf16.gmra.mrb[0].mxu0 %v86
  %v661 = vpop.f32.mrb[0].mxu0
  %v662 = vadd.f32 0.0, %v661
  %v663 = vpop.f32.mrb[0].mxu0
  %v664 = vpop.f32.mrb[0].mxu0
  %v665 = vadd.f32 0.0, %v664
  %v666 = vpop.f32.mrb[0].mxu0
  %667 = vmatprep.mubr.bf16.mxu0 0
  %668 = vmatmul.mubr.bf16.gmra.mrb[0].mxu0 %v87
  %v669 = vpop.f32.mrb[0].mxu0
  %v670 = vadd.f32 0.0, %v669
  %v671 = vpop.f32.mrb[0].mxu0
  %v672 = vpop.f32.mrb[0].mxu0
  %v673 = vadd.f32 0.0, %v672
  %v674 = vpop.f32.mrb[0].mxu0
  %675 = vmatprep.mubr.bf16.mxu0 0
  %676 = vmatmul.mubr.bf16.gmra.mrb[0].mxu0 %v88
  %v677 = vpop.f32.mrb[0].mxu0
  %v678 = vadd.f32 0.0, %v677
  %v679 = vpop.f32.mrb[0].mxu0
  %v680 = vpop.f32.mrb[0].mxu0
  %v681 = vadd.f32 0.0, %v680
  %v682 = vpop.f32.mrb[0].mxu0
  %683 = vmatprep.mubr.bf16.mxu0 0
  %684 = vmatmul.mubr.bf16.gmra.mrb[0].mxu0 %v89
  %v685 = vpop.f32.mrb[0].mxu0
  %v686 = vadd.f32 0.0, %v685
  %v687 = vpop.f32.mrb[0].mxu0
  %v688 = vpop.f32.mrb[0].mxu0
  %v689 = vadd.f32 0.0, %v688
  %v690 = vpop.f32.mrb[0].mxu0
  %691 = vmatprep.mubr.bf16.mxu0 0
  %692 = vmatmul.mubr.bf16.gmra.mrb[0].mxu0 %v90
  %v693 = vpop.f32.mrb[0].mxu0
  %v694 = vadd.f32 0.0, %v693
  %v695 = vpop.f32.mrb[0].mxu0
  %v696 = vpop.f32.mrb[0].mxu0
  %v697 = vadd.f32 0.0, %v696
  %v698 = vpop.f32.mrb[0].mxu0
  %699 = vmatprep.mubr.bf16.mxu0 0
  %700 = vmatmul.mubr.bf16.gmra.mrb[0].mxu0 %v91
  %v701 = vpop.f32.mrb[0].mxu0
  %v702 = vadd.f32 0.0, %v701
  %v703 = vpop.f32.mrb[0].mxu0
  %v704 = vpop.f32.mrb[0].mxu0
  %v705 = vadd.f32 0.0, %v704
  %v706 = vpop.f32.mrb[0].mxu0
  %707 = vmatprep.mubr.bf16.mxu0 0
  %708 = vmatmul.mubr.bf16.gmra.mrb[0].mxu0 %v92
  %v709 = vpop.f32.mrb[0].mxu0
  %v710 = vadd.f32 0.0, %v709
  %v711 = vpop.f32.mrb[0].mxu0
  %v712 = vpop.f32.mrb[0].mxu0
  %v713 = vadd.f32 0.0, %v712
  %v714 = vpop.f32.mrb[0].mxu0
  %715 = vdwg.mxu0
  %v716 = vpack.c.bf16 %v657, %v654
  %v717 = vpack.c.bf16 %v665, %v662
  %v718 = vpack.c.bf16 %v673, %v670
  %v719 = vpack.c.bf16 %v681, %v678
  %v720 = vpack.c.bf16 %v689, %v686
  %v721 = vpack.c.bf16 %v697, %v694
  %v722 = vpack.c.bf16 %v705, %v702
  %v723 = vpack.c.bf16 %v713, %v710
  %s724 = scalar_lea.vmem %s3, 128
  %v725 = vld [vmem:[%s724] sm:$0xf]
  %v726 = vld [vmem:[%s724 + $0x4] sm:$0xf]
  %v727 = vld [vmem:[%s724 + $0x8] sm:$0xf]
  %v728 = vld [vmem:[%s724 + $0xc] sm:$0xf]
  %v729 = vld [vmem:[%s724 + $0x10] sm:$0xf]
  %v730 = vld [vmem:[%s724 + $0x14] sm:$0xf]
  %v731 = vld [vmem:[%s724 + $0x18] sm:$0xf]
  %v732 = vld [vmem:[%s724 + $0x1c] sm:$0xf]
  %v733 = vld [vmem:[%s724 + $0x20] sm:$0xf]
  %v734 = vld [vmem:[%s724 + $0x24] sm:$0xf]
  %v735 = vld [vmem:[%s724 + $0x28] sm:$0xf]
  %v736 = vld [vmem:[%s724 + $0x2c] sm:$0xf]
  %v737 = vld [vmem:[%s724 + $0x30] sm:$0xf]
  %v738 = vld [vmem:[%s724 + $0x34] sm:$0xf]
  %v739 = vld [vmem:[%s724 + $0x38] sm:$0xf]
  %v740 = vld [vmem:[%s724 + $0x3c] sm:$0xf]
  %v741 = vld [vmem:[%s4 + $0x2] sm:$0x1]
  %v742 = vlaneseq
  %v743 = vshrl.u32 %v742, 7
  %v744 = vsub.s32 0, %v743
  %v745 = vrot.slane %v741, %v744
  %v762 = vunpack.c.l.b16 %v725
  %v763 = vunpack.c.l.b16 %v726
  %v764 = vunpack.c.l.b16 %v727
  %v765 = vunpack.c.l.b16 %v728
  %v766 = vunpack.c.l.b16 %v729
  %v767 = vunpack.c.l.b16 %v730
  %v768 = vunpack.c.l.b16 %v731
  %v769 = vunpack.c.l.b16 %v732
  %v770 = vunpack.c.l.b16 %v733
  %v771 = vunpack.c.l.b16 %v734
  %v772 = vunpack.c.l.b16 %v735
  %v773 = vunpack.c.l.b16 %v736
  %v774 = vunpack.c.l.b16 %v737
  %v775 = vunpack.c.l.b16 %v738
  %v776 = vunpack.c.l.b16 %v739
  %v777 = vunpack.c.l.b16 %v740
  %v778 = vpack.c.b16 %v763, %v762
  %v779 = vpack.c.b16 %v765, %v764
  %v780 = vpack.c.b16 %v767, %v766
  %v781 = vpack.c.b16 %v769, %v768
  %v782 = vpack.c.b16 %v771, %v770
  %v783 = vpack.c.b16 %v773, %v772
  %v784 = vpack.c.b16 %v775, %v774
  %v785 = vpack.c.b16 %v777, %v776
  %794 = vmatprep.subr.bf16.mxu0 0
  %795 = vmatpush1.bf16.msra.mxu0 %v778
  %796 = vmatprep.subr.bf16.mxu0 0
  %797 = vmatpush1.bf16.msra.mxu0 %v779
  %798 = vmatprep.subr.bf16.mxu0 0
  %799 = vmatpush1.bf16.msra.mxu0 %v780
  %800 = vmatprep.subr.bf16.mxu0 0
  %801 = vmatpush1.bf16.msra.mxu0 %v781
  %802 = vmatprep.subr.bf16.mxu0 0
  %803 = vmatpush1.bf16.msra.mxu0 %v782
  %804 = vmatprep.subr.bf16.mxu0 0
  %805 = vmatpush1.bf16.msra.mxu0 %v783
  %806 = vmatprep.subr.bf16.mxu0 0
  %807 = vmatpush1.bf16.msra.mxu0 %v784
  %808 = vmatprep.subr.bf16.mxu0 0
  %809 = vmatpush1.bf16.msra.mxu0 %v785
  %810 = vmatprep.subr.bf16.mxu0 0
  %811 = vmatpush1.bf16.msra.mxu0 0
  %812 = vmatprep.subr.bf16.mxu0 0
  %813 = vmatpush1.bf16.msra.mxu0 0
  %814 = vmatprep.subr.bf16.mxu0 0
  %815 = vmatpush1.bf16.msra.mxu0 0
  %816 = vmatprep.subr.bf16.mxu0 0
  %817 = vmatpush1.bf16.msra.mxu0 0
  %818 = vmatprep.subr.bf16.mxu0 0
  %819 = vmatpush1.bf16.msra.mxu0 0
  %820 = vmatprep.subr.bf16.mxu0 0
  %821 = vmatpush1.bf16.msra.mxu0 0
  %822 = vmatprep.subr.bf16.mxu0 0
  %823 = vmatpush1.bf16.msra.mxu0 0
  %824 = vmatprep.subr.bf16.mxu0 0
  %825 = vmatpush1.bf16.msra.mxu0 0
  %826 = vmatprep.mubr.bf16.mxu0 0
  %827 = vmatmul.mubr.bf16.gmra.mrb[0].mxu0 %v716
  %v828 = vpop.f32.mrb[0].mxu0
  %v829 = vadd.f32 %v745, %v828
  %v830 = vpop.f32.mrb[0].mxu0
  %v831 = vpop.f32.mrb[0].mxu0
  %v832 = vadd.f32 %v745, %v831
  %v833 = vpop.f32.mrb[0].mxu0
  %834 = vmatprep.mubr.bf16.mxu0 0
  %835 = vmatmul.mubr.bf16.gmra.mrb[0].mxu0 %v717
  %v836 = vpop.f32.mrb[0].mxu0
  %v837 = vadd.f32 %v745, %v836
  %v838 = vpop.f32.mrb[0].mxu0
  %v839 = vpop.f32.mrb[0].mxu0
  %v840 = vadd.f32 %v745, %v839
  %v841 = vpop.f32.mrb[0].mxu0
  %842 = vmatprep.mubr.bf16.mxu0 0
  %843 = vmatmul.mubr.bf16.gmra.mrb[0].mxu0 %v718
  %v844 = vpop.f32.mrb[0].mxu0
  %v845 = vadd.f32 %v745, %v844
  %v846 = vpop.f32.mrb[0].mxu0
  %v847 = vpop.f32.mrb[0].mxu0
  %v848 = vadd.f32 %v745, %v847
  %v849 = vpop.f32.mrb[0].mxu0
  %850 = vmatprep.mubr.bf16.mxu0 0
  %851 = vmatmul.mubr.bf16.gmra.mrb[0].mxu0 %v719
  %v852 = vpop.f32.mrb[0].mxu0
  %v853 = vadd.f32 %v745, %v852
  %v854 = vpop.f32.mrb[0].mxu0
  %v855 = vpop.f32.mrb[0].mxu0
  %v856 = vadd.f32 %v745, %v855
  %v857 = vpop.f32.mrb[0].mxu0
  %858 = vmatprep.mubr.bf16.mxu0 0
  %859 = vmatmul.mubr.bf16.gmra.mrb[0].mxu0 %v720
  %v860 = vpop.f32.mrb[0].mxu0
  %v861 = vadd.f32 %v745, %v860
  %v862 = vpop.f32.mrb[0].mxu0
  %v863 = vpop.f32.mrb[0].mxu0
  %v864 = vadd.f32 %v745, %v863
  %v865 = vpop.f32.mrb[0].mxu0
  %866 = vmatprep.mubr.bf16.mxu0 0
  %867 = vmatmul.mubr.bf16.gmra.mrb[0].mxu0 %v721
  %v868 = vpop.f32.mrb[0].mxu0
  %v869 = vadd.f32 %v745, %v868
  %v870 = vpop.f32.mrb[0].mxu0
  %v871 = vpop.f32.mrb[0].mxu0
  %v872 = vadd.f32 %v745, %v871
  %v873 = vpop.f32.mrb[0].mxu0
  %874 = vmatprep.mubr.bf16.mxu0 0
  %875 = vmatmul.mubr.bf16.gmra.mrb[0].mxu0 %v722
  %v876 = vpop.f32.mrb[0].mxu0
  %v877 = vadd.f32 %v745, %v876
  %v878 = vpop.f32.mrb[0].mxu0
  %v879 = vpop.f32.mrb[0].mxu0
  %v880 = vadd.f32 %v745, %v879
  %v881 = vpop.f32.mrb[0].mxu0
  %882 = vmatprep.mubr.bf16.mxu0 0
  %883 = vmatmul.mubr.bf16.gmra.mrb[0].mxu0 %v723
  %v884 = vpop.f32.mrb[0].mxu0
  %v885 = vadd.f32 %v745, %v884
  %v886 = vpop.f32.mrb[0].mxu0
  %v887 = vpop.f32.mrb[0].mxu0
  %v888 = vadd.f32 %v745, %v887
  %v889 = vpop.f32.mrb[0].mxu0
  %890 = vdwg.mxu0
  %v891 = vmax.f32 %v829, 0.0
  %v892 = vmax.f32 %v832, 0.0
  %v893 = vmax.f32 %v837, 0.0
  %v894 = vmax.f32 %v840, 0.0
  %v895 = vmax.f32 %v845, 0.0
  %v896 = vmax.f32 %v848, 0.0
  %v897 = vmax.f32 %v853, 0.0
  %v898 = vmax.f32 %v856, 0.0
  %v899 = vmax.f32 %v861, 0.0
  %v900 = vmax.f32 %v864, 0.0
  %v901 = vmax.f32 %v869, 0.0
  %v902 = vmax.f32 %v872, 0.0
  %v903 = vmax.f32 %v877, 0.0
  %v904 = vmax.f32 %v880, 0.0
  %v905 = vmax.f32 %v885, 0.0
  %v906 = vmax.f32 %v888, 0.0
  %v907 = vpack.c.bf16 %v892, %v891
  %v908 = vpack.c.bf16 %v894, %v893
  %v909 = vpack.c.bf16 %v896, %v895
  %v910 = vpack.c.bf16 %v898, %v897
  %v911 = vpack.c.bf16 %v900, %v899
  %v912 = vpack.c.bf16 %v902, %v901
  %v913 = vpack.c.bf16 %v904, %v903
  %v914 = vpack.c.bf16 %v906, %v905
  %s915 = scalar_lea.vmem %s3, 192
  %v916 = vld [vmem:[%s915] sm:$0xf]
  %v917 = vld [vmem:[%s915 + $0x4] sm:$0xf]
  %v918 = vld [vmem:[%s915 + $0x8] sm:$0xf]
  %v919 = vld [vmem:[%s915 + $0xc] sm:$0xf]
  %v920 = vld [vmem:[%s915 + $0x10] sm:$0xf]
  %v921 = vld [vmem:[%s915 + $0x14] sm:$0xf]
  %v922 = vld [vmem:[%s915 + $0x18] sm:$0xf]
  %v923 = vld [vmem:[%s915 + $0x1c] sm:$0xf]
  %v924 = vld [vmem:[%s915 + $0x20] sm:$0xf]
  %v925 = vld [vmem:[%s915 + $0x24] sm:$0xf]
  %v926 = vld [vmem:[%s915 + $0x28] sm:$0xf]
  %v927 = vld [vmem:[%s915 + $0x2c] sm:$0xf]
  %v928 = vld [vmem:[%s915 + $0x30] sm:$0xf]
  %v929 = vld [vmem:[%s915 + $0x34] sm:$0xf]
  %v930 = vld [vmem:[%s915 + $0x38] sm:$0xf]
  %v931 = vld [vmem:[%s915 + $0x3c] sm:$0xf]
  %v932 = vld [vmem:[%s4 + $0x3] sm:$0x1]
  %v933 = vlaneseq
  %v934 = vshrl.u32 %v933, 7
  %v935 = vsub.s32 0, %v934
  %v936 = vrot.slane %v932, %v935
  %v953 = vunpack.c.l.b16 %v916
  %v954 = vunpack.c.l.b16 %v917
  %v955 = vunpack.c.l.b16 %v918
  %v956 = vunpack.c.l.b16 %v919
  %v957 = vunpack.c.l.b16 %v920
  %v958 = vunpack.c.l.b16 %v921
  %v959 = vunpack.c.l.b16 %v922
  %v960 = vunpack.c.l.b16 %v923
  %v961 = vunpack.c.l.b16 %v924
  %v962 = vunpack.c.l.b16 %v925
  %v963 = vunpack.c.l.b16 %v926
  %v964 = vunpack.c.l.b16 %v927
  %v965 = vunpack.c.l.b16 %v928
  %v966 = vunpack.c.l.b16 %v929
  %v967 = vunpack.c.l.b16 %v930
  %v968 = vunpack.c.l.b16 %v931
  %v969 = vpack.c.b16 %v954, %v953
  %v970 = vpack.c.b16 %v956, %v955
  %v971 = vpack.c.b16 %v958, %v957
  %v972 = vpack.c.b16 %v960, %v959
  %v973 = vpack.c.b16 %v962, %v961
  %v974 = vpack.c.b16 %v964, %v963
  %v975 = vpack.c.b16 %v966, %v965
  %v976 = vpack.c.b16 %v968, %v967
  %985 = vmatprep.subr.bf16.mxu0 0
  %986 = vmatpush1.bf16.msra.mxu0 %v969
  %987 = vmatprep.subr.bf16.mxu0 0
  %988 = vmatpush1.bf16.msra.mxu0 %v970
  %989 = vmatprep.subr.bf16.mxu0 0
  %990 = vmatpush1.bf16.msra.mxu0 %v971
  %991 = vmatprep.subr.bf16.mxu0 0
  %992 = vmatpush1.bf16.msra.mxu0 %v972
  %993 = vmatprep.subr.bf16.mxu0 0
  %994 = vmatpush1.bf16.msra.mxu0 %v973
  %995 = vmatprep.subr.bf16.mxu0 0
  %996 = vmatpush1.bf16.msra.mxu0 %v974
  %997 = vmatprep.subr.bf16.mxu0 0
  %998 = vmatpush1.bf16.msra.mxu0 %v975
  %999 = vmatprep.subr.bf16.mxu0 0
  %1000 = vmatpush1.bf16.msra.mxu0 %v976
  %1001 = vmatprep.subr.bf16.mxu0 0
  %1002 = vmatpush1.bf16.msra.mxu0 0
  %1003 = vmatprep.subr.bf16.mxu0 0
  %1004 = vmatpush1.bf16.msra.mxu0 0
  %1005 = vmatprep.subr.bf16.mxu0 0
  %1006 = vmatpush1.bf16.msra.mxu0 0
  %1007 = vmatprep.subr.bf16.mxu0 0
  %1008 = vmatpush1.bf16.msra.mxu0 0
  %1009 = vmatprep.subr.bf16.mxu0 0
  %1010 = vmatpush1.bf16.msra.mxu0 0
  %1011 = vmatprep.subr.bf16.mxu0 0
  %1012 = vmatpush1.bf16.msra.mxu0 0
  %1013 = vmatprep.subr.bf16.mxu0 0
  %1014 = vmatpush1.bf16.msra.mxu0 0
  %1015 = vmatprep.subr.bf16.mxu0 0
  %1016 = vmatpush1.bf16.msra.mxu0 0
  %1017 = vmatprep.mubr.bf16.mxu0 0
  %1018 = vmatmul.mubr.bf16.gmra.mrb[0].mxu0 %v907
  %v1019 = vpop.f32.mrb[0].mxu0
  %v1020 = vadd.f32 %v936, %v1019
  %v1021 = vpop.f32.mrb[0].mxu0
  %v1022 = vpop.f32.mrb[0].mxu0
  %v1023 = vadd.f32 %v936, %v1022
  %v1024 = vpop.f32.mrb[0].mxu0
  %1025 = vmatprep.mubr.bf16.mxu0 0
  %1026 = vmatmul.mubr.bf16.gmra.mrb[0].mxu0 %v908
  %v1027 = vpop.f32.mrb[0].mxu0
  %v1028 = vadd.f32 %v936, %v1027
  %v1029 = vpop.f32.mrb[0].mxu0
  %v1030 = vpop.f32.mrb[0].mxu0
  %v1031 = vadd.f32 %v936, %v1030
  %v1032 = vpop.f32.mrb[0].mxu0
  %1033 = vmatprep.mubr.bf16.mxu0 0
  %1034 = vmatmul.mubr.bf16.gmra.mrb[0].mxu0 %v909
  %v1035 = vpop.f32.mrb[0].mxu0
  %v1036 = vadd.f32 %v936, %v1035
  %v1037 = vpop.f32.mrb[0].mxu0
  %v1038 = vpop.f32.mrb[0].mxu0
  %v1039 = vadd.f32 %v936, %v1038
  %v1040 = vpop.f32.mrb[0].mxu0
  %1041 = vmatprep.mubr.bf16.mxu0 0
  %1042 = vmatmul.mubr.bf16.gmra.mrb[0].mxu0 %v910
  %v1043 = vpop.f32.mrb[0].mxu0
  %v1044 = vadd.f32 %v936, %v1043
  %v1045 = vpop.f32.mrb[0].mxu0
  %v1046 = vpop.f32.mrb[0].mxu0
  %v1047 = vadd.f32 %v936, %v1046
  %v1048 = vpop.f32.mrb[0].mxu0
  %1049 = vmatprep.mubr.bf16.mxu0 0
  %1050 = vmatmul.mubr.bf16.gmra.mrb[0].mxu0 %v911
  %v1051 = vpop.f32.mrb[0].mxu0
  %v1052 = vadd.f32 %v936, %v1051
  %v1053 = vpop.f32.mrb[0].mxu0
  %v1054 = vpop.f32.mrb[0].mxu0
  %v1055 = vadd.f32 %v936, %v1054
  %v1056 = vpop.f32.mrb[0].mxu0
  %1057 = vmatprep.mubr.bf16.mxu0 0
  %1058 = vmatmul.mubr.bf16.gmra.mrb[0].mxu0 %v912
  %v1059 = vpop.f32.mrb[0].mxu0
  %v1060 = vadd.f32 %v936, %v1059
  %v1061 = vpop.f32.mrb[0].mxu0
  %v1062 = vpop.f32.mrb[0].mxu0
  %v1063 = vadd.f32 %v936, %v1062
  %v1064 = vpop.f32.mrb[0].mxu0
  %1065 = vmatprep.mubr.bf16.mxu0 0
  %1066 = vmatmul.mubr.bf16.gmra.mrb[0].mxu0 %v913
  %v1067 = vpop.f32.mrb[0].mxu0
  %v1068 = vadd.f32 %v936, %v1067
  %v1069 = vpop.f32.mrb[0].mxu0
  %v1070 = vpop.f32.mrb[0].mxu0
  %v1071 = vadd.f32 %v936, %v1070
  %v1072 = vpop.f32.mrb[0].mxu0
  %1073 = vmatprep.mubr.bf16.mxu0 0
  %1074 = vmatmul.mubr.bf16.gmra.mrb[0].mxu0 %v914
  %v1075 = vpop.f32.mrb[0].mxu0
  %v1076 = vadd.f32 %v936, %v1075
  %v1077 = vpop.f32.mrb[0].mxu0
  %v1078 = vpop.f32.mrb[0].mxu0
  %v1079 = vadd.f32 %v936, %v1078
  %v1080 = vpop.f32.mrb[0].mxu0
  %1081 = vdwg.mxu0
  %v1082 = vpack.c.bf16 %v1023, %v1020
  %v1083 = vpack.c.bf16 %v1031, %v1028
  %v1084 = vpack.c.bf16 %v1039, %v1036
  %v1085 = vpack.c.bf16 %v1047, %v1044
  %v1086 = vpack.c.bf16 %v1055, %v1052
  %v1087 = vpack.c.bf16 %v1063, %v1060
  %v1088 = vpack.c.bf16 %v1071, %v1068
  %v1089 = vpack.c.bf16 %v1079, %v1076
  %1090 = vmatprep.subr.bf16.mxu0 0
  %1091 = vmatpush1.bf16.msra.mxu0 %v1082
  %1092 = vmatprep.subr.bf16.mxu0 0
  %1093 = vmatpush1.bf16.msra.mxu0 %v1083
  %1094 = vmatprep.subr.bf16.mxu0 0
  %1095 = vmatpush1.bf16.msra.mxu0 %v1084
  %1096 = vmatprep.subr.bf16.mxu0 0
  %1097 = vmatpush1.bf16.msra.mxu0 %v1085
  %1098 = vmatprep.subr.bf16.mxu0 0
  %1099 = vmatpush1.bf16.msra.mxu0 %v1086
  %1100 = vmatprep.subr.bf16.mxu0 0
  %1101 = vmatpush1.bf16.msra.mxu0 %v1087
  %1102 = vmatprep.subr.bf16.mxu0 0
  %1103 = vmatpush1.bf16.msra.mxu0 %v1088
  %1104 = vmatprep.subr.bf16.mxu0 0
  %1105 = vmatpush1.bf16.msra.mxu0 %v1089
  %1106 = vmatprep.subr.bf16.mxu0 0
  %1107 = vmatpush1.bf16.msra.mxu0 0
  %1108 = vmatprep.subr.bf16.mxu0 0
  %1109 = vmatpush1.bf16.msra.mxu0 0
  %1110 = vmatprep.subr.bf16.mxu0 0
  %1111 = vmatpush1.bf16.msra.mxu0 0
  %1112 = vmatprep.subr.bf16.mxu0 0
  %1113 = vmatpush1.bf16.msra.mxu0 0
  %1114 = vmatprep.subr.bf16.mxu0 0
  %1115 = vmatpush1.bf16.msra.mxu0 0
  %1116 = vmatprep.subr.bf16.mxu0 0
  %1117 = vmatpush1.bf16.msra.mxu0 0
  %1118 = vmatprep.subr.bf16.mxu0 0
  %1119 = vmatpush1.bf16.msra.mxu0 0
  %1120 = vmatprep.subr.bf16.mxu0 0
  %1121 = vmatpush1.bf16.msra.mxu0 0
  %1122 = vmatprep.mubr.bf16.mxu0 0
  %1123 = vmatmul.mubr.bf16.gmra.mrb[0].mxu0 %v85
  %v1124 = vpop.f32.mrb[0].mxu0
  %v1125 = vadd.f32 0.0, %v1124
  %v1126 = vpop.f32.mrb[0].mxu0
  %v1127 = vpop.f32.mrb[0].mxu0
  %v1128 = vadd.f32 0.0, %v1127
  %v1129 = vpop.f32.mrb[0].mxu0
  %1130 = vmatprep.mubr.bf16.mxu0 0
  %1131 = vmatmul.mubr.bf16.gmra.mrb[0].mxu0 %v86
  %v1132 = vpop.f32.mrb[0].mxu0
  %v1133 = vadd.f32 0.0, %v1132
  %v1134 = vpop.f32.mrb[0].mxu0
  %v1135 = vpop.f32.mrb[0].mxu0
  %v1136 = vadd.f32 0.0, %v1135
  %v1137 = vpop.f32.mrb[0].mxu0
  %1138 = vmatprep.mubr.bf16.mxu0 0
  %1139 = vmatmul.mubr.bf16.gmra.mrb[0].mxu0 %v87
  %v1140 = vpop.f32.mrb[0].mxu0
  %v1141 = vadd.f32 0.0, %v1140
  %v1142 = vpop.f32.mrb[0].mxu0
  %v1143 = vpop.f32.mrb[0].mxu0
  %v1144 = vadd.f32 0.0, %v1143
  %v1145 = vpop.f32.mrb[0].mxu0
  %1146 = vmatprep.mubr.bf16.mxu0 0
  %1147 = vmatmul.mubr.bf16.gmra.mrb[0].mxu0 %v88
  %v1148 = vpop.f32.mrb[0].mxu0
  %v1149 = vadd.f32 0.0, %v1148
  %v1150 = vpop.f32.mrb[0].mxu0
  %v1151 = vpop.f32.mrb[0].mxu0
  %v1152 = vadd.f32 0.0, %v1151
  %v1153 = vpop.f32.mrb[0].mxu0
  %1154 = vmatprep.mubr.bf16.mxu0 0
  %1155 = vmatmul.mubr.bf16.gmra.mrb[0].mxu0 %v89
  %v1156 = vpop.f32.mrb[0].mxu0
  %v1157 = vadd.f32 0.0, %v1156
  %v1158 = vpop.f32.mrb[0].mxu0
  %v1159 = vpop.f32.mrb[0].mxu0
  %v1160 = vadd.f32 0.0, %v1159
  %v1161 = vpop.f32.mrb[0].mxu0
  %1162 = vmatprep.mubr.bf16.mxu0 0
  %1163 = vmatmul.mubr.bf16.gmra.mrb[0].mxu0 %v90
  %v1164 = vpop.f32.mrb[0].mxu0
  %v1165 = vadd.f32 0.0, %v1164
  %v1166 = vpop.f32.mrb[0].mxu0
  %v1167 = vpop.f32.mrb[0].mxu0
  %v1168 = vadd.f32 0.0, %v1167
  %v1169 = vpop.f32.mrb[0].mxu0
  %1170 = vmatprep.mubr.bf16.mxu0 0
  %1171 = vmatmul.mubr.bf16.gmra.mrb[0].mxu0 %v91
  %v1172 = vpop.f32.mrb[0].mxu0
  %v1173 = vadd.f32 0.0, %v1172
  %v1174 = vpop.f32.mrb[0].mxu0
  %v1175 = vpop.f32.mrb[0].mxu0
  %v1176 = vadd.f32 0.0, %v1175
  %v1177 = vpop.f32.mrb[0].mxu0
  %1178 = vmatprep.mubr.bf16.mxu0 0
  %1179 = vmatmul.mubr.bf16.gmra.mrb[0].mxu0 %v92
  %v1180 = vpop.f32.mrb[0].mxu0
  %v1181 = vadd.f32 0.0, %v1180
  %v1182 = vpop.f32.mrb[0].mxu0
  %v1183 = vpop.f32.mrb[0].mxu0
  %v1184 = vadd.f32 0.0, %v1183
  %v1185 = vpop.f32.mrb[0].mxu0
  %1186 = vdwg.mxu0
  %v1187 = vpack.c.bf16 %v1128, %v1125
  %v1188 = vpack.c.bf16 %v1136, %v1133
  %v1189 = vpack.c.bf16 %v1144, %v1141
  %v1190 = vpack.c.bf16 %v1152, %v1149
  %v1191 = vpack.c.bf16 %v1160, %v1157
  %v1192 = vpack.c.bf16 %v1168, %v1165
  %v1193 = vpack.c.bf16 %v1176, %v1173
  %v1194 = vpack.c.bf16 %v1184, %v1181
  %s1195 = scalar_lea.vmem %s3, 256
  %v1196 = vld [vmem:[%s1195] sm:$0xf]
  %v1197 = vld [vmem:[%s1195 + $0x4] sm:$0xf]
  %v1198 = vld [vmem:[%s1195 + $0x8] sm:$0xf]
  %v1199 = vld [vmem:[%s1195 + $0xc] sm:$0xf]
  %v1200 = vld [vmem:[%s1195 + $0x10] sm:$0xf]
  %v1201 = vld [vmem:[%s1195 + $0x14] sm:$0xf]
  %v1202 = vld [vmem:[%s1195 + $0x18] sm:$0xf]
  %v1203 = vld [vmem:[%s1195 + $0x1c] sm:$0xf]
  %v1204 = vld [vmem:[%s1195 + $0x20] sm:$0xf]
  %v1205 = vld [vmem:[%s1195 + $0x24] sm:$0xf]
  %v1206 = vld [vmem:[%s1195 + $0x28] sm:$0xf]
  %v1207 = vld [vmem:[%s1195 + $0x2c] sm:$0xf]
  %v1208 = vld [vmem:[%s1195 + $0x30] sm:$0xf]
  %v1209 = vld [vmem:[%s1195 + $0x34] sm:$0xf]
  %v1210 = vld [vmem:[%s1195 + $0x38] sm:$0xf]
  %v1211 = vld [vmem:[%s1195 + $0x3c] sm:$0xf]
  %v1212 = vld [vmem:[%s4 + $0x4] sm:$0x1]
  %v1213 = vlaneseq
  %v1214 = vshrl.u32 %v1213, 7
  %v1215 = vsub.s32 0, %v1214
  %v1216 = vrot.slane %v1212, %v1215
  %v1233 = vunpack.c.l.b16 %v1196
  %v1234 = vunpack.c.l.b16 %v1197
  %v1235 = vunpack.c.l.b16 %v1198
  %v1236 = vunpack.c.l.b16 %v1199
  %v1237 = vunpack.c.l.b16 %v1200
  %v1238 = vunpack.c.l.b16 %v1201
  %v1239 = vunpack.c.l.b16 %v1202
  %v1240 = vunpack.c.l.b16 %v1203
  %v1241 = vunpack.c.l.b16 %v1204
  %v1242 = vunpack.c.l.b16 %v1205
  %v1243 = vunpack.c.l.b16 %v1206
  %v1244 = vunpack.c.l.b16 %v1207
  %v1245 = vunpack.c.l.b16 %v1208
  %v1246 = vunpack.c.l.b16 %v1209
  %v1247 = vunpack.c.l.b16 %v1210
  %v1248 = vunpack.c.l.b16 %v1211
  %v1249 = vpack.c.b16 %v1234, %v1233
  %v1250 = vpack.c.b16 %v1236, %v1235
  %v1251 = vpack.c.b16 %v1238, %v1237
  %v1252 = vpack.c.b16 %v1240, %v1239
  %v1253 = vpack.c.b16 %v1242, %v1241
  %v1254 = vpack.c.b16 %v1244, %v1243
  %v1255 = vpack.c.b16 %v1246, %v1245
  %v1256 = vpack.c.b16 %v1248, %v1247
  %1265 = vmatprep.subr.bf16.mxu0 0
  %1266 = vmatpush1.bf16.msra.mxu0 %v1249
  %1267 = vmatprep.subr.bf16.mxu0 0
  %1268 = vmatpush1.bf16.msra.mxu0 %v1250
  %1269 = vmatprep.subr.bf16.mxu0 0
  %1270 = vmatpush1.bf16.msra.mxu0 %v1251
  %1271 = vmatprep.subr.bf16.mxu0 0
  %1272 = vmatpush1.bf16.msra.mxu0 %v1252
  %1273 = vmatprep.subr.bf16.mxu0 0
  %1274 = vmatpush1.bf16.msra.mxu0 %v1253
  %1275 = vmatprep.subr.bf16.mxu0 0
  %1276 = vmatpush1.bf16.msra.mxu0 %v1254
  %1277 = vmatprep.subr.bf16.mxu0 0
  %1278 = vmatpush1.bf16.msra.mxu0 %v1255
  %1279 = vmatprep.subr.bf16.mxu0 0
  %1280 = vmatpush1.bf16.msra.mxu0 %v1256
  %1281 = vmatprep.subr.bf16.mxu0 0
  %1282 = vmatpush1.bf16.msra.mxu0 0
  %1283 = vmatprep.subr.bf16.mxu0 0
  %1284 = vmatpush1.bf16.msra.mxu0 0
  %1285 = vmatprep.subr.bf16.mxu0 0
  %1286 = vmatpush1.bf16.msra.mxu0 0
  %1287 = vmatprep.subr.bf16.mxu0 0
  %1288 = vmatpush1.bf16.msra.mxu0 0
  %1289 = vmatprep.subr.bf16.mxu0 0
  %1290 = vmatpush1.bf16.msra.mxu0 0
  %1291 = vmatprep.subr.bf16.mxu0 0
  %1292 = vmatpush1.bf16.msra.mxu0 0
  %1293 = vmatprep.subr.bf16.mxu0 0
  %1294 = vmatpush1.bf16.msra.mxu0 0
  %1295 = vmatprep.subr.bf16.mxu0 0
  %1296 = vmatpush1.bf16.msra.mxu0 0
  %1297 = vmatprep.mubr.bf16.mxu0 0
  %1298 = vmatmul.mubr.bf16.gmra.mrb[0].mxu0 %v1187
  %v1299 = vpop.f32.mrb[0].mxu0
  %v1300 = vadd.f32 %v1216, %v1299
  %v1301 = vpop.f32.mrb[0].mxu0
  %v1302 = vpop.f32.mrb[0].mxu0
  %v1303 = vadd.f32 %v1216, %v1302
  %v1304 = vpop.f32.mrb[0].mxu0
  %1305 = vmatprep.mubr.bf16.mxu0 0
  %1306 = vmatmul.mubr.bf16.gmra.mrb[0].mxu0 %v1188
  %v1307 = vpop.f32.mrb[0].mxu0
  %v1308 = vadd.f32 %v1216, %v1307
  %v1309 = vpop.f32.mrb[0].mxu0
  %v1310 = vpop.f32.mrb[0].mxu0
  %v1311 = vadd.f32 %v1216, %v1310
  %v1312 = vpop.f32.mrb[0].mxu0
  %1313 = vmatprep.mubr.bf16.mxu0 0
  %1314 = vmatmul.mubr.bf16.gmra.mrb[0].mxu0 %v1189
  %v1315 = vpop.f32.mrb[0].mxu0
  %v1316 = vadd.f32 %v1216, %v1315
  %v1317 = vpop.f32.mrb[0].mxu0
  %v1318 = vpop.f32.mrb[0].mxu0
  %v1319 = vadd.f32 %v1216, %v1318
  %v1320 = vpop.f32.mrb[0].mxu0
  %1321 = vmatprep.mubr.bf16.mxu0 0
  %1322 = vmatmul.mubr.bf16.gmra.mrb[0].mxu0 %v1190
  %v1323 = vpop.f32.mrb[0].mxu0
  %v1324 = vadd.f32 %v1216, %v1323
  %v1325 = vpop.f32.mrb[0].mxu0
  %v1326 = vpop.f32.mrb[0].mxu0
  %v1327 = vadd.f32 %v1216, %v1326
  %v1328 = vpop.f32.mrb[0].mxu0
  %1329 = vmatprep.mubr.bf16.mxu0 0
  %1330 = vmatmul.mubr.bf16.gmra.mrb[0].mxu0 %v1191
  %v1331 = vpop.f32.mrb[0].mxu0
  %v1332 = vadd.f32 %v1216, %v1331
  %v1333 = vpop.f32.mrb[0].mxu0
  %v1334 = vpop.f32.mrb[0].mxu0
  %v1335 = vadd.f32 %v1216, %v1334
  %v1336 = vpop.f32.mrb[0].mxu0
  %1337 = vmatprep.mubr.bf16.mxu0 0
  %1338 = vmatmul.mubr.bf16.gmra.mrb[0].mxu0 %v1192
  %v1339 = vpop.f32.mrb[0].mxu0
  %v1340 = vadd.f32 %v1216, %v1339
  %v1341 = vpop.f32.mrb[0].mxu0
  %v1342 = vpop.f32.mrb[0].mxu0
  %v1343 = vadd.f32 %v1216, %v1342
  %v1344 = vpop.f32.mrb[0].mxu0
  %1345 = vmatprep.mubr.bf16.mxu0 0
  %1346 = vmatmul.mubr.bf16.gmra.mrb[0].mxu0 %v1193
  %v1347 = vpop.f32.mrb[0].mxu0
  %v1348 = vadd.f32 %v1216, %v1347
  %v1349 = vpop.f32.mrb[0].mxu0
  %v1350 = vpop.f32.mrb[0].mxu0
  %v1351 = vadd.f32 %v1216, %v1350
  %v1352 = vpop.f32.mrb[0].mxu0
  %1353 = vmatprep.mubr.bf16.mxu0 0
  %1354 = vmatmul.mubr.bf16.gmra.mrb[0].mxu0 %v1194
  %v1355 = vpop.f32.mrb[0].mxu0
  %v1356 = vadd.f32 %v1216, %v1355
  %v1357 = vpop.f32.mrb[0].mxu0
  %v1358 = vpop.f32.mrb[0].mxu0
  %v1359 = vadd.f32 %v1216, %v1358
  %v1360 = vpop.f32.mrb[0].mxu0
  %1361 = vdwg.mxu0
  %v1362 = vmax.f32 %v1300, 0.0
  %v1363 = vmax.f32 %v1303, 0.0
  %v1364 = vmax.f32 %v1308, 0.0
  %v1365 = vmax.f32 %v1311, 0.0
  %v1366 = vmax.f32 %v1316, 0.0
  %v1367 = vmax.f32 %v1319, 0.0
  %v1368 = vmax.f32 %v1324, 0.0
  %v1369 = vmax.f32 %v1327, 0.0
  %v1370 = vmax.f32 %v1332, 0.0
  %v1371 = vmax.f32 %v1335, 0.0
  %v1372 = vmax.f32 %v1340, 0.0
  %v1373 = vmax.f32 %v1343, 0.0
  %v1374 = vmax.f32 %v1348, 0.0
  %v1375 = vmax.f32 %v1351, 0.0
  %v1376 = vmax.f32 %v1356, 0.0
  %v1377 = vmax.f32 %v1359, 0.0
  %v1378 = vpack.c.bf16 %v1363, %v1362
  %v1379 = vpack.c.bf16 %v1365, %v1364
  %v1380 = vpack.c.bf16 %v1367, %v1366
  %v1381 = vpack.c.bf16 %v1369, %v1368
  %v1382 = vpack.c.bf16 %v1371, %v1370
  %v1383 = vpack.c.bf16 %v1373, %v1372
  %v1384 = vpack.c.bf16 %v1375, %v1374
  %v1385 = vpack.c.bf16 %v1377, %v1376
  %s1386 = scalar_lea.vmem %s3, 320
  %v1387 = vld [vmem:[%s1386] sm:$0xf]
  %v1388 = vld [vmem:[%s1386 + $0x4] sm:$0xf]
  %v1389 = vld [vmem:[%s1386 + $0x8] sm:$0xf]
  %v1390 = vld [vmem:[%s1386 + $0xc] sm:$0xf]
  %v1391 = vld [vmem:[%s1386 + $0x10] sm:$0xf]
  %v1392 = vld [vmem:[%s1386 + $0x14] sm:$0xf]
  %v1393 = vld [vmem:[%s1386 + $0x18] sm:$0xf]
  %v1394 = vld [vmem:[%s1386 + $0x1c] sm:$0xf]
  %v1395 = vld [vmem:[%s1386 + $0x20] sm:$0xf]
  %v1396 = vld [vmem:[%s1386 + $0x24] sm:$0xf]
  %v1397 = vld [vmem:[%s1386 + $0x28] sm:$0xf]
  %v1398 = vld [vmem:[%s1386 + $0x2c] sm:$0xf]
  %v1399 = vld [vmem:[%s1386 + $0x30] sm:$0xf]
  %v1400 = vld [vmem:[%s1386 + $0x34] sm:$0xf]
  %v1401 = vld [vmem:[%s1386 + $0x38] sm:$0xf]
  %v1402 = vld [vmem:[%s1386 + $0x3c] sm:$0xf]
  %v1403 = vld [vmem:[%s4 + $0x5] sm:$0x1]
  %v1404 = vlaneseq
  %v1405 = vshrl.u32 %v1404, 7
  %v1406 = vsub.s32 0, %v1405
  %v1407 = vrot.slane %v1403, %v1406
  %v1424 = vunpack.c.l.b16 %v1387
  %v1425 = vunpack.c.l.b16 %v1388
  %v1426 = vunpack.c.l.b16 %v1389
  %v1427 = vunpack.c.l.b16 %v1390
  %v1428 = vunpack.c.l.b16 %v1391
  %v1429 = vunpack.c.l.b16 %v1392
  %v1430 = vunpack.c.l.b16 %v1393
  %v1431 = vunpack.c.l.b16 %v1394
  %v1432 = vunpack.c.l.b16 %v1395
  %v1433 = vunpack.c.l.b16 %v1396
  %v1434 = vunpack.c.l.b16 %v1397
  %v1435 = vunpack.c.l.b16 %v1398
  %v1436 = vunpack.c.l.b16 %v1399
  %v1437 = vunpack.c.l.b16 %v1400
  %v1438 = vunpack.c.l.b16 %v1401
  %v1439 = vunpack.c.l.b16 %v1402
  %v1440 = vpack.c.b16 %v1425, %v1424
  %v1441 = vpack.c.b16 %v1427, %v1426
  %v1442 = vpack.c.b16 %v1429, %v1428
  %v1443 = vpack.c.b16 %v1431, %v1430
  %v1444 = vpack.c.b16 %v1433, %v1432
  %v1445 = vpack.c.b16 %v1435, %v1434
  %v1446 = vpack.c.b16 %v1437, %v1436
  %v1447 = vpack.c.b16 %v1439, %v1438
  %1456 = vmatprep.subr.bf16.mxu0 0
  %1457 = vmatpush1.bf16.msra.mxu0 %v1440
  %1458 = vmatprep.subr.bf16.mxu0 0
  %1459 = vmatpush1.bf16.msra.mxu0 %v1441
  %1460 = vmatprep.subr.bf16.mxu0 0
  %1461 = vmatpush1.bf16.msra.mxu0 %v1442
  %1462 = vmatprep.subr.bf16.mxu0 0
  %1463 = vmatpush1.bf16.msra.mxu0 %v1443
  %1464 = vmatprep.subr.bf16.mxu0 0
  %1465 = vmatpush1.bf16.msra.mxu0 %v1444
  %1466 = vmatprep.subr.bf16.mxu0 0
  %1467 = vmatpush1.bf16.msra.mxu0 %v1445
  %1468 = vmatprep.subr.bf16.mxu0 0
  %1469 = vmatpush1.bf16.msra.mxu0 %v1446
  %1470 = vmatprep.subr.bf16.mxu0 0
  %1471 = vmatpush1.bf16.msra.mxu0 %v1447
  %1472 = vmatprep.subr.bf16.mxu0 0
  %1473 = vmatpush1.bf16.msra.mxu0 0
  %1474 = vmatprep.subr.bf16.mxu0 0
  %1475 = vmatpush1.bf16.msra.mxu0 0
  %1476 = vmatprep.subr.bf16.mxu0 0
  %1477 = vmatpush1.bf16.msra.mxu0 0
  %1478 = vmatprep.subr.bf16.mxu0 0
  %1479 = vmatpush1.bf16.msra.mxu0 0
  %1480 = vmatprep.subr.bf16.mxu0 0
  %1481 = vmatpush1.bf16.msra.mxu0 0
  %1482 = vmatprep.subr.bf16.mxu0 0
  %1483 = vmatpush1.bf16.msra.mxu0 0
  %1484 = vmatprep.subr.bf16.mxu0 0
  %1485 = vmatpush1.bf16.msra.mxu0 0
  %1486 = vmatprep.subr.bf16.mxu0 0
  %1487 = vmatpush1.bf16.msra.mxu0 0
  %1488 = vmatprep.mubr.bf16.mxu0 0
  %1489 = vmatmul.mubr.bf16.gmra.mrb[0].mxu0 %v1378
  %v1490 = vpop.f32.mrb[0].mxu0
  %v1491 = vadd.f32 %v1407, %v1490
  %v1492 = vpop.f32.mrb[0].mxu0
  %v1493 = vpop.f32.mrb[0].mxu0
  %v1494 = vadd.f32 %v1407, %v1493
  %v1495 = vpop.f32.mrb[0].mxu0
  %1496 = vmatprep.mubr.bf16.mxu0 0
  %1497 = vmatmul.mubr.bf16.gmra.mrb[0].mxu0 %v1379
  %v1498 = vpop.f32.mrb[0].mxu0
  %v1499 = vadd.f32 %v1407, %v1498
  %v1500 = vpop.f32.mrb[0].mxu0
  %v1501 = vpop.f32.mrb[0].mxu0
  %v1502 = vadd.f32 %v1407, %v1501
  %v1503 = vpop.f32.mrb[0].mxu0
  %1504 = vmatprep.mubr.bf16.mxu0 0
  %1505 = vmatmul.mubr.bf16.gmra.mrb[0].mxu0 %v1380
  %v1506 = vpop.f32.mrb[0].mxu0
  %v1507 = vadd.f32 %v1407, %v1506
  %v1508 = vpop.f32.mrb[0].mxu0
  %v1509 = vpop.f32.mrb[0].mxu0
  %v1510 = vadd.f32 %v1407, %v1509
  %v1511 = vpop.f32.mrb[0].mxu0
  %1512 = vmatprep.mubr.bf16.mxu0 0
  %1513 = vmatmul.mubr.bf16.gmra.mrb[0].mxu0 %v1381
  %v1514 = vpop.f32.mrb[0].mxu0
  %v1515 = vadd.f32 %v1407, %v1514
  %v1516 = vpop.f32.mrb[0].mxu0
  %v1517 = vpop.f32.mrb[0].mxu0
  %v1518 = vadd.f32 %v1407, %v1517
  %v1519 = vpop.f32.mrb[0].mxu0
  %1520 = vmatprep.mubr.bf16.mxu0 0
  %1521 = vmatmul.mubr.bf16.gmra.mrb[0].mxu0 %v1382
  %v1522 = vpop.f32.mrb[0].mxu0
  %v1523 = vadd.f32 %v1407, %v1522
  %v1524 = vpop.f32.mrb[0].mxu0
  %v1525 = vpop.f32.mrb[0].mxu0
  %v1526 = vadd.f32 %v1407, %v1525
  %v1527 = vpop.f32.mrb[0].mxu0
  %1528 = vmatprep.mubr.bf16.mxu0 0
  %1529 = vmatmul.mubr.bf16.gmra.mrb[0].mxu0 %v1383
  %v1530 = vpop.f32.mrb[0].mxu0
  %v1531 = vadd.f32 %v1407, %v1530
  %v1532 = vpop.f32.mrb[0].mxu0
  %v1533 = vpop.f32.mrb[0].mxu0
  %v1534 = vadd.f32 %v1407, %v1533
  %v1535 = vpop.f32.mrb[0].mxu0
  %1536 = vmatprep.mubr.bf16.mxu0 0
  %1537 = vmatmul.mubr.bf16.gmra.mrb[0].mxu0 %v1384
  %v1538 = vpop.f32.mrb[0].mxu0
  %v1539 = vadd.f32 %v1407, %v1538
  %v1540 = vpop.f32.mrb[0].mxu0
  %v1541 = vpop.f32.mrb[0].mxu0
  %v1542 = vadd.f32 %v1407, %v1541
  %v1543 = vpop.f32.mrb[0].mxu0
  %1544 = vmatprep.mubr.bf16.mxu0 0
  %1545 = vmatmul.mubr.bf16.gmra.mrb[0].mxu0 %v1385
  %v1546 = vpop.f32.mrb[0].mxu0
  %v1547 = vadd.f32 %v1407, %v1546
  %v1548 = vpop.f32.mrb[0].mxu0
  %v1549 = vpop.f32.mrb[0].mxu0
  %v1550 = vadd.f32 %v1407, %v1549
  %v1551 = vpop.f32.mrb[0].mxu0
  %1552 = vdwg.mxu0
  %v1553 = vpack.c.bf16 %v1494, %v1491
  %v1554 = vpack.c.bf16 %v1502, %v1499
  %v1555 = vpack.c.bf16 %v1510, %v1507
  %v1556 = vpack.c.bf16 %v1518, %v1515
  %v1557 = vpack.c.bf16 %v1526, %v1523
  %v1558 = vpack.c.bf16 %v1534, %v1531
  %v1559 = vpack.c.bf16 %v1542, %v1539
  %v1560 = vpack.c.bf16 %v1550, %v1547
  %v1561 = vld [vmem:[%s1] sm:$0xf]
  %v1562 = vld [vmem:[%s1 + $0x4] sm:$0xf]
  %v1565 = vunpack.c.l.b16 %v1561
  %v1566 = vunpack.c.l.b16 %v1562
  %v1567 = vpack.c.b16 %v1566, %v1565
  %1569 = vmatprep.subr.bf16.mxu0 0
  %1570 = vmatpush1.bf16.msra.mxu0 %v1553
  %1571 = vmatprep.subr.bf16.mxu0 0
  %1572 = vmatpush1.bf16.msra.mxu0 %v1554
  %1573 = vmatprep.subr.bf16.mxu0 0
  %1574 = vmatpush1.bf16.msra.mxu0 %v1555
  %1575 = vmatprep.subr.bf16.mxu0 0
  %1576 = vmatpush1.bf16.msra.mxu0 %v1556
  %1577 = vmatprep.subr.bf16.mxu0 0
  %1578 = vmatpush1.bf16.msra.mxu0 %v1557
  %1579 = vmatprep.subr.bf16.mxu0 0
  %1580 = vmatpush1.bf16.msra.mxu0 %v1558
  %1581 = vmatprep.subr.bf16.mxu0 0
  %1582 = vmatpush1.bf16.msra.mxu0 %v1559
  %1583 = vmatprep.subr.bf16.mxu0 0
  %1584 = vmatpush1.bf16.msra.mxu0 %v1560
  %1585 = vmatprep.subr.bf16.mxu0 0
  %1586 = vmatpush1.bf16.msra.mxu0 0
  %1587 = vmatprep.subr.bf16.mxu0 0
  %1588 = vmatpush1.bf16.msra.mxu0 0
  %1589 = vmatprep.subr.bf16.mxu0 0
  %1590 = vmatpush1.bf16.msra.mxu0 0
  %1591 = vmatprep.subr.bf16.mxu0 0
  %1592 = vmatpush1.bf16.msra.mxu0 0
  %1593 = vmatprep.subr.bf16.mxu0 0
  %1594 = vmatpush1.bf16.msra.mxu0 0
  %1595 = vmatprep.subr.bf16.mxu0 0
  %1596 = vmatpush1.bf16.msra.mxu0 0
  %1597 = vmatprep.subr.bf16.mxu0 0
  %1598 = vmatpush1.bf16.msra.mxu0 0
  %1599 = vmatprep.subr.bf16.mxu0 0
  %1600 = vmatpush1.bf16.msra.mxu0 0
  %1601 = vmatprep.mubr.bf16.mxu0 0
  %1602 = vmatmul.mubr.bf16.gmra.mrb[0].mxu0 %v1567
  %v1603 = vpop.f32.mrb[0].mxu0
  %v1604 = vadd.f32 0.0, %v1603
  %v1605 = vpop.f32.mrb[0].mxu0
  %v1606 = vpop.f32.mrb[0].mxu0
  %v1607 = vadd.f32 0.0, %v1606
  %v1608 = vpop.f32.mrb[0].mxu0
  %1609 = vdwg.mxu0
  %v1610 = vpack.c.bf16 %v1607, %v1604
  %s1611 = scalar_lea.vmem %s3, 384
  %v1612 = vld [vmem:[%s1611] sm:$0xf]
  %v1613 = vld [vmem:[%s1611 + $0x4] sm:$0xf]
  %v1614 = vld [vmem:[%s1611 + $0x8] sm:$0xf]
  %v1615 = vld [vmem:[%s1611 + $0xc] sm:$0xf]
  %v1616 = vld [vmem:[%s1611 + $0x10] sm:$0xf]
  %v1617 = vld [vmem:[%s1611 + $0x14] sm:$0xf]
  %v1618 = vld [vmem:[%s1611 + $0x18] sm:$0xf]
  %v1619 = vld [vmem:[%s1611 + $0x1c] sm:$0xf]
  %v1620 = vld [vmem:[%s1611 + $0x20] sm:$0xf]
  %v1621 = vld [vmem:[%s1611 + $0x24] sm:$0xf]
  %v1622 = vld [vmem:[%s1611 + $0x28] sm:$0xf]
  %v1623 = vld [vmem:[%s1611 + $0x2c] sm:$0xf]
  %v1624 = vld [vmem:[%s1611 + $0x30] sm:$0xf]
  %v1625 = vld [vmem:[%s1611 + $0x34] sm:$0xf]
  %v1626 = vld [vmem:[%s1611 + $0x38] sm:$0xf]
  %v1627 = vld [vmem:[%s1611 + $0x3c] sm:$0xf]
  %v1628 = vld [vmem:[%s4 + $0x6] sm:$0x1]
  %v1629 = vlaneseq
  %v1630 = vshrl.u32 %v1629, 7
  %v1631 = vsub.s32 0, %v1630
  %v1632 = vrot.slane %v1628, %v1631
  %v1649 = vunpack.c.l.b16 %v1612
  %v1650 = vunpack.c.l.b16 %v1613
  %v1651 = vunpack.c.l.b16 %v1614
  %v1652 = vunpack.c.l.b16 %v1615
  %v1653 = vunpack.c.l.b16 %v1616
  %v1654 = vunpack.c.l.b16 %v1617
  %v1655 = vunpack.c.l.b16 %v1618
  %v1656 = vunpack.c.l.b16 %v1619
  %v1657 = vunpack.c.l.b16 %v1620
  %v1658 = vunpack.c.l.b16 %v1621
  %v1659 = vunpack.c.l.b16 %v1622
  %v1660 = vunpack.c.l.b16 %v1623
  %v1661 = vunpack.c.l.b16 %v1624
  %v1662 = vunpack.c.l.b16 %v1625
  %v1663 = vunpack.c.l.b16 %v1626
  %v1664 = vunpack.c.l.b16 %v1627
  %v1665 = vpack.c.b16 %v1650, %v1649
  %v1666 = vpack.c.b16 %v1652, %v1651
  %v1667 = vpack.c.b16 %v1654, %v1653
  %v1668 = vpack.c.b16 %v1656, %v1655
  %v1669 = vpack.c.b16 %v1658, %v1657
  %v1670 = vpack.c.b16 %v1660, %v1659
  %v1671 = vpack.c.b16 %v1662, %v1661
  %v1672 = vpack.c.b16 %v1664, %v1663
  %1681 = vmatprep.subr.bf16.mxu0 0
  %1682 = vmatpush1.bf16.msra.mxu0 %v1665
  %1683 = vmatprep.subr.bf16.mxu0 0
  %1684 = vmatpush1.bf16.msra.mxu0 %v1666
  %1685 = vmatprep.subr.bf16.mxu0 0
  %1686 = vmatpush1.bf16.msra.mxu0 %v1667
  %1687 = vmatprep.subr.bf16.mxu0 0
  %1688 = vmatpush1.bf16.msra.mxu0 %v1668
  %1689 = vmatprep.subr.bf16.mxu0 0
  %1690 = vmatpush1.bf16.msra.mxu0 %v1669
  %1691 = vmatprep.subr.bf16.mxu0 0
  %1692 = vmatpush1.bf16.msra.mxu0 %v1670
  %1693 = vmatprep.subr.bf16.mxu0 0
  %1694 = vmatpush1.bf16.msra.mxu0 %v1671
  %1695 = vmatprep.subr.bf16.mxu0 0
  %1696 = vmatpush1.bf16.msra.mxu0 %v1672
  %1697 = vmatprep.subr.bf16.mxu0 0
  %1698 = vmatpush1.bf16.msra.mxu0 0
  %1699 = vmatprep.subr.bf16.mxu0 0
  %1700 = vmatpush1.bf16.msra.mxu0 0
  %1701 = vmatprep.subr.bf16.mxu0 0
  %1702 = vmatpush1.bf16.msra.mxu0 0
  %1703 = vmatprep.subr.bf16.mxu0 0
  %1704 = vmatpush1.bf16.msra.mxu0 0
  %1705 = vmatprep.subr.bf16.mxu0 0
  %1706 = vmatpush1.bf16.msra.mxu0 0
  %1707 = vmatprep.subr.bf16.mxu0 0
  %1708 = vmatpush1.bf16.msra.mxu0 0
  %1709 = vmatprep.subr.bf16.mxu0 0
  %1710 = vmatpush1.bf16.msra.mxu0 0
  %1711 = vmatprep.subr.bf16.mxu0 0
  %1712 = vmatpush1.bf16.msra.mxu0 0
  %1713 = vmatprep.mubr.bf16.mxu0 0
  %1714 = vmatmul.mubr.bf16.gmra.mrb[0].mxu0 %v1610
  %v1715 = vpop.f32.mrb[0].mxu0
  %v1716 = vadd.f32 %v1632, %v1715
  %v1717 = vpop.f32.mrb[0].mxu0
  %v1718 = vpop.f32.mrb[0].mxu0
  %v1719 = vadd.f32 %v1632, %v1718
  %v1720 = vpop.f32.mrb[0].mxu0
  %1721 = vdwg.mxu0
  %v1722 = vmax.f32 %v1716, 0.0
  %v1723 = vmax.f32 %v1719, 0.0
  %v1724 = vpack.c.bf16 %v1723, %v1722
  %s1725 = scalar_lea.vmem %s3, 448
  %v1726 = vld [vmem:[%s1725] sm:$0xf]
  %v1727 = vld [vmem:[%s1725 + $0x4] sm:$0xf]
  %v1728 = vld [vmem:[%s1725 + $0x8] sm:$0xf]
  %v1729 = vld [vmem:[%s1725 + $0xc] sm:$0xf]
  %v1730 = vld [vmem:[%s1725 + $0x10] sm:$0xf]
  %v1731 = vld [vmem:[%s1725 + $0x14] sm:$0xf]
  %v1732 = vld [vmem:[%s1725 + $0x18] sm:$0xf]
  %v1733 = vld [vmem:[%s1725 + $0x1c] sm:$0xf]
  %v1734 = vld [vmem:[%s1725 + $0x20] sm:$0xf]
  %v1735 = vld [vmem:[%s1725 + $0x24] sm:$0xf]
  %v1736 = vld [vmem:[%s1725 + $0x28] sm:$0xf]
  %v1737 = vld [vmem:[%s1725 + $0x2c] sm:$0xf]
  %v1738 = vld [vmem:[%s1725 + $0x30] sm:$0xf]
  %v1739 = vld [vmem:[%s1725 + $0x34] sm:$0xf]
  %v1740 = vld [vmem:[%s1725 + $0x38] sm:$0xf]
  %v1741 = vld [vmem:[%s1725 + $0x3c] sm:$0xf]
  %v1742 = vld [vmem:[%s4 + $0x7] sm:$0x1]
  %v1743 = vlaneseq
  %v1744 = vshrl.u32 %v1743, 7
  %v1745 = vsub.s32 0, %v1744
  %v1746 = vrot.slane %v1742, %v1745
  %v1763 = vunpack.c.l.b16 %v1726
  %v1764 = vunpack.c.l.b16 %v1727
  %v1765 = vunpack.c.l.b16 %v1728
  %v1766 = vunpack.c.l.b16 %v1729
  %v1767 = vunpack.c.l.b16 %v1730
  %v1768 = vunpack.c.l.b16 %v1731
  %v1769 = vunpack.c.l.b16 %v1732
  %v1770 = vunpack.c.l.b16 %v1733
  %v1771 = vunpack.c.l.b16 %v1734
  %v1772 = vunpack.c.l.b16 %v1735
  %v1773 = vunpack.c.l.b16 %v1736
  %v1774 = vunpack.c.l.b16 %v1737
  %v1775 = vunpack.c.l.b16 %v1738
  %v1776 = vunpack.c.l.b16 %v1739
  %v1777 = vunpack.c.l.b16 %v1740
  %v1778 = vunpack.c.l.b16 %v1741
  %v1779 = vpack.c.b16 %v1764, %v1763
  %v1780 = vpack.c.b16 %v1766, %v1765
  %v1781 = vpack.c.b16 %v1768, %v1767
  %v1782 = vpack.c.b16 %v1770, %v1769
  %v1783 = vpack.c.b16 %v1772, %v1771
  %v1784 = vpack.c.b16 %v1774, %v1773
  %v1785 = vpack.c.b16 %v1776, %v1775
  %v1786 = vpack.c.b16 %v1778, %v1777
  %1795 = vmatprep.subr.bf16.mxu0 0
  %1796 = vmatpush1.bf16.msra.mxu0 %v1779
  %1797 = vmatprep.subr.bf16.mxu0 0
  %1798 = vmatpush1.bf16.msra.mxu0 %v1780
  %1799 = vmatprep.subr.bf16.mxu0 0
  %1800 = vmatpush1.bf16.msra.mxu0 %v1781
  %1801 = vmatprep.subr.bf16.mxu0 0
  %1802 = vmatpush1.bf16.msra.mxu0 %v1782
  %1803 = vmatprep.subr.bf16.mxu0 0
  %1804 = vmatpush1.bf16.msra.mxu0 %v1783
  %1805 = vmatprep.subr.bf16.mxu0 0
  %1806 = vmatpush1.bf16.msra.mxu0 %v1784
  %1807 = vmatprep.subr.bf16.mxu0 0
  %1808 = vmatpush1.bf16.msra.mxu0 %v1785
  %1809 = vmatprep.subr.bf16.mxu0 0
  %1810 = vmatpush1.bf16.msra.mxu0 %v1786
  %1811 = vmatprep.subr.bf16.mxu0 0
  %1812 = vmatpush1.bf16.msra.mxu0 0
  %1813 = vmatprep.subr.bf16.mxu0 0
  %1814 = vmatpush1.bf16.msra.mxu0 0
  %1815 = vmatprep.subr.bf16.mxu0 0
  %1816 = vmatpush1.bf16.msra.mxu0 0
  %1817 = vmatprep.subr.bf16.mxu0 0
  %1818 = vmatpush1.bf16.msra.mxu0 0
  %1819 = vmatprep.subr.bf16.mxu0 0
  %1820 = vmatpush1.bf16.msra.mxu0 0
  %1821 = vmatprep.subr.bf16.mxu0 0
  %1822 = vmatpush1.bf16.msra.mxu0 0
  %1823 = vmatprep.subr.bf16.mxu0 0
  %1824 = vmatpush1.bf16.msra.mxu0 0
  %1825 = vmatprep.subr.bf16.mxu0 0
  %1826 = vmatpush1.bf16.msra.mxu0 0
  %1827 = vmatprep.mubr.bf16.mxu0 0
  %1828 = vmatmul.mubr.bf16.gmra.mrb[0].mxu0 %v1724
  %v1829 = vpop.f32.mrb[0].mxu0
  %v1830 = vadd.f32 %v1746, %v1829
  %v1831 = vpop.f32.mrb[0].mxu0
  %v1832 = vpop.f32.mrb[0].mxu0
  %v1833 = vadd.f32 %v1746, %v1832
  %v1834 = vpop.f32.mrb[0].mxu0
  %1835 = vdwg.mxu0
  %v1836 = vmax.f32 %v1830, 0.0
  %v1837 = vmax.f32 %v1833, 0.0
  %v1838 = vpack.c.bf16 %v1837, %v1836
  %s1839 = scalar_lea.vmem %s3, 512
  %v1840 = vld [vmem:[%s1839] sm:$0xf]
  %v1841 = vld [vmem:[%s1839 + $0x4] sm:$0xf]
  %v1842 = vld [vmem:[%s1839 + $0x8] sm:$0xf]
  %v1843 = vld [vmem:[%s1839 + $0xc] sm:$0xf]
  %v1844 = vld [vmem:[%s1839 + $0x10] sm:$0xf]
  %v1845 = vld [vmem:[%s1839 + $0x14] sm:$0xf]
  %v1846 = vld [vmem:[%s1839 + $0x18] sm:$0xf]
  %v1847 = vld [vmem:[%s1839 + $0x1c] sm:$0xf]
  %v1848 = vld [vmem:[%s1839 + $0x20] sm:$0xf]
  %v1849 = vld [vmem:[%s1839 + $0x24] sm:$0xf]
  %v1850 = vld [vmem:[%s1839 + $0x28] sm:$0xf]
  %v1851 = vld [vmem:[%s1839 + $0x2c] sm:$0xf]
  %v1852 = vld [vmem:[%s1839 + $0x30] sm:$0xf]
  %v1853 = vld [vmem:[%s1839 + $0x34] sm:$0xf]
  %v1854 = vld [vmem:[%s1839 + $0x38] sm:$0xf]
  %v1855 = vld [vmem:[%s1839 + $0x3c] sm:$0xf]
  %v1856 = vld [vmem:[%s4 + $0x8] sm:$0x1]
  %v1857 = vlaneseq
  %v1858 = vshrl.u32 %v1857, 7
  %v1859 = vsub.s32 0, %v1858
  %v1860 = vrot.slane %v1856, %v1859
  %v1877 = vunpack.c.l.b16 %v1840
  %v1878 = vunpack.c.l.b16 %v1841
  %v1879 = vunpack.c.l.b16 %v1842
  %v1880 = vunpack.c.l.b16 %v1843
  %v1881 = vunpack.c.l.b16 %v1844
  %v1882 = vunpack.c.l.b16 %v1845
  %v1883 = vunpack.c.l.b16 %v1846
  %v1884 = vunpack.c.l.b16 %v1847
  %v1885 = vunpack.c.l.b16 %v1848
  %v1886 = vunpack.c.l.b16 %v1849
  %v1887 = vunpack.c.l.b16 %v1850
  %v1888 = vunpack.c.l.b16 %v1851
  %v1889 = vunpack.c.l.b16 %v1852
  %v1890 = vunpack.c.l.b16 %v1853
  %v1891 = vunpack.c.l.b16 %v1854
  %v1892 = vunpack.c.l.b16 %v1855
  %v1893 = vpack.c.b16 %v1878, %v1877
  %v1894 = vpack.c.b16 %v1880, %v1879
  %v1895 = vpack.c.b16 %v1882, %v1881
  %v1896 = vpack.c.b16 %v1884, %v1883
  %v1897 = vpack.c.b16 %v1886, %v1885
  %v1898 = vpack.c.b16 %v1888, %v1887
  %v1899 = vpack.c.b16 %v1890, %v1889
  %v1900 = vpack.c.b16 %v1892, %v1891
  %1909 = vmatprep.subr.bf16.mxu0 0
  %1910 = vmatpush1.bf16.msra.mxu0 %v1893
  %1911 = vmatprep.subr.bf16.mxu0 0
  %1912 = vmatpush1.bf16.msra.mxu0 %v1894
  %1913 = vmatprep.subr.bf16.mxu0 0
  %1914 = vmatpush1.bf16.msra.mxu0 %v1895
  %1915 = vmatprep.subr.bf16.mxu0 0
  %1916 = vmatpush1.bf16.msra.mxu0 %v1896
  %1917 = vmatprep.subr.bf16.mxu0 0
  %1918 = vmatpush1.bf16.msra.mxu0 %v1897
  %1919 = vmatprep.subr.bf16.mxu0 0
  %1920 = vmatpush1.bf16.msra.mxu0 %v1898
  %1921 = vmatprep.subr.bf16.mxu0 0
  %1922 = vmatpush1.bf16.msra.mxu0 %v1899
  %1923 = vmatprep.subr.bf16.mxu0 0
  %1924 = vmatpush1.bf16.msra.mxu0 %v1900
  %1925 = vmatprep.subr.bf16.mxu0 0
  %1926 = vmatpush1.bf16.msra.mxu0 0
  %1927 = vmatprep.subr.bf16.mxu0 0
  %1928 = vmatpush1.bf16.msra.mxu0 0
  %1929 = vmatprep.subr.bf16.mxu0 0
  %1930 = vmatpush1.bf16.msra.mxu0 0
  %1931 = vmatprep.subr.bf16.mxu0 0
  %1932 = vmatpush1.bf16.msra.mxu0 0
  %1933 = vmatprep.subr.bf16.mxu0 0
  %1934 = vmatpush1.bf16.msra.mxu0 0
  %1935 = vmatprep.subr.bf16.mxu0 0
  %1936 = vmatpush1.bf16.msra.mxu0 0
  %1937 = vmatprep.subr.bf16.mxu0 0
  %1938 = vmatpush1.bf16.msra.mxu0 0
  %1939 = vmatprep.subr.bf16.mxu0 0
  %1940 = vmatpush1.bf16.msra.mxu0 0
  %1941 = vmatprep.mubr.bf16.mxu0 0
  %1942 = vmatmul.mubr.bf16.gmra.mrb[0].mxu0 %v1838
  %v1943 = vpop.f32.mrb[0].mxu0
  %v1944 = vadd.f32 %v1860, %v1943
  %v1945 = vpop.f32.mrb[0].mxu0
  %v1946 = vpop.f32.mrb[0].mxu0
  %v1947 = vadd.f32 %v1860, %v1946
  %v1948 = vpop.f32.mrb[0].mxu0
  %1949 = vdwg.mxu0
  %1950 = vst [vmem:[%s5] sm:$0xff] %v1944
  %1951 = vst [vmem:[%s5 + $0x8] sm:$0xff] %v1947
  // Predicated region
  $region22: #{gine_forward.1} parent=0 // pred_check
    _
  $region23: #{gine_forward.1} parent=0 // pred_check_branch
    %1953 = sbr.rel (0) target = $region25
  $region24: #{gine_forward.1} parent=0 // pred_region
    _
  $region25: #{gine_forward.1} parent=0 // pred_fallthru
    _
  // Predicated region
  $region26: #{gine_forward.1} parent=0 // pred_check
    _
  $region27: #{gine_forward.1} parent=0 // pred_check_branch
    %1955 = sbr.rel (0) target = $region29
  $region28: #{gine_forward.1} parent=0 // pred_region
    _
  $region29: #{gine_forward.1} parent=0 // pred_fallthru
    _

</llo_original>
